<compile_context>
chip_gen: v7x
topology: tpu7x:2x2x1
jax: 0.10.0
libtpu: 0.0.40
codegen_flags: <defaults>
</compile_context>

<pallas_src>
import math

import jax
import jax.numpy as jnp
from jax import lax
from jax.experimental import pallas as pl
from jax.experimental.pallas import tpu as pltpu


def _round_up(n, m):
    return ((n + m - 1) // m) * m


# ----------------------------------------------------------------------------
# Single fused kernel: all layers + recurrence + fc head.
# ----------------------------------------------------------------------------
def _make_atlstm_kernel(S, H, L, Bp, dd):
    """Builds the fused kernel (statics captured by closure).

    Ref layout (inputs, output, scratch):
      x_ref        (S*Bp, Dp)    f32   time-major, batch- and feature-padded
      h0_ref       (L, 2*Bp, H)  f32   rows [0:Bp]=fwd state, [Bp:2Bp]=rev state
      c0_ref       (L, 2*Bp, H)  f32
      per layer l: wx_l (D_l, 8H) bf16 | whh_l (H, 8H) bf16 | b_l (1, 8H) f32
      fcw_ref      (1, 2H)       f32
      fcb_ref      (1, 1)        f32
      out_ref      (Bp, 1)       f32
      gx_ref       (S*Bp, 8H)    f32   VMEM scratch: current layer's input gates
      act refs     4 x (S*Bp, H) bf16  VMEM scratch: ping-pong fwd/rev layer out
    """
    G4 = 4 * H

    def kernel(*refs):
        x_ref, h0_ref, c0_ref = refs[0], refs[1], refs[2]
        w_refs = refs[3:3 + 3 * L]
        fcw_ref, fcb_ref = refs[3 + 3 * L], refs[4 + 3 * L]
        out_ref = refs[5 + 3 * L]
        gx_ref = refs[6 + 3 * L]
        act_refs = refs[7 + 3 * L: 11 + 3 * L]   # (fwd_a, rev_a, fwd_b, rev_b)

        # Rows [0:Bp] of the combined state = forward stream, [Bp:2Bp] = reverse.
        # Built once (outside all loops -- broadcasts are not CSE'd).
        row_is_fwd = lax.broadcasted_iota(jnp.int32, (2 * Bp, G4), 0) < Bp

        h_f_dd = None
        h_r_dd = None

        for l in range(L):
            wx = w_refs[3 * l + 0][...]      # (D_l, 8H) bf16
            whh = w_refs[3 * l + 1][...]     # (H, 8H)  bf16, resident all steps
            b = w_refs[3 * l + 2][...]       # (1, 8H)  f32

            # ---- input projection: whole sequence, both directions at once --
            if l == 0:
                gx = jnp.dot(x_ref[...].astype(jnp.bfloat16), wx,
                             preferred_element_type=jnp.float32)
            else:
                prev_f = act_refs[2 * ((l - 1) % 2) + 0][...]
                prev_r = act_refs[2 * ((l - 1) % 2) + 1][...]
                gx = (jnp.dot(prev_f, wx[0:H, :],
                              preferred_element_type=jnp.float32)
                      + jnp.dot(prev_r, wx[H:2 * H, :],
                                preferred_element_type=jnp.float32))
            gx_ref[...] = gx + b             # (S*Bp, 8H) f32 in VMEM scratch

            # ---- bidirectional recurrence, both directions in lockstep ------
            h = h0_ref[l]                    # (2*Bp, H) f32
            c = c0_ref[l]
            last = (l == L - 1)
            # Only timestep dd of the top layer feeds the fc head.
            T = max(dd + 1, S - dd) if last else S
            cur_f = act_refs[2 * (l % 2) + 0]
            cur_r = act_refs[2 * (l % 2) + 1]

            for t in range(T):               # fully unrolled (S small, static)
                s_rev = S - 1 - t
                # One combined recurrent matmul for both directions.
                hh = jnp.dot(h.astype(jnp.bfloat16), whh,
                             preferred_element_type=jnp.float32)  # (2Bp, 8H)
                g_hh = jnp.where(row_is_fwd, hh[:, 0:G4], hh[:, G4:2 * G4])
                gx_f = gx_ref[pl.ds(t * Bp, Bp), 0:G4]            # fwd @ t
                gx_r = gx_ref[pl.ds(s_rev * Bp, Bp), G4:2 * G4]   # rev @ S-1-t
                g = g_hh + jnp.concatenate([gx_f, gx_r], axis=0)  # (2Bp, 4H)

                # Gate order (PyTorch): i, f, g, o.  One sigmoid over the full
                # block (the wasted g-column sigmoid is free), one tanh for g.
                sig = jax.nn.sigmoid(g)
                i_g = sig[:, 0:H]
                f_g = sig[:, H:2 * H]
                o_g = sig[:, 3 * H:4 * H]
                g_g = jnp.tanh(g[:, 2 * H:3 * H])
                c = f_g * c + i_g * g_g
                h = o_g * jnp.tanh(c)

                if last:
                    if t == dd:
                        h_f_dd = h[0:Bp, :]          # fwd hidden @ seq pos dd
                    if t == S - 1 - dd:
                        h_r_dd = h[Bp:2 * Bp, :]     # rev hidden @ seq pos dd
                else:
                    # Reverse handled purely by indexing -- no [::-1], no concat.
                    cur_f[pl.ds(t * Bp, Bp), :] = h[0:Bp, :].astype(cur_f.dtype)
                    cur_r[pl.ds(s_rev * Bp, Bp), :] = (
                        h[Bp:2 * Bp, :].astype(cur_r.dtype))

        # ---- fused fc head: VPU multiply + lane reduction (no N=1 matmul) ---
        fcw = fcw_ref[...]                   # (1, 2H) f32
        y = (jnp.sum(h_f_dd * fcw[:, 0:H], axis=-1, keepdims=True)
             + jnp.sum(h_r_dd * fcw[:, H:2 * H], axis=-1, keepdims=True)
             + fcb_ref[...])
        out_ref[...] = y

    return kernel


# ----------------------------------------------------------------------------
# ATLSTM forward (type == 1 path: fp32 initial states).
# ----------------------------------------------------------------------------
def atlstm_forward(x, params, h0, c0, dd):
    """x: (B, S, input_size) batch_first, like the PyTorch module. Returns (B, 1)."""
    B, S, Din = x.shape
    L = params["num_layer"]
    H = params["hidden_size"]
    assert 0 <= dd < S
    Dp = params["lstm"][0][0].shape[0]       # layer-0 input width (padded to 8)
    Bp = _round_up(B, 8)                     # pad batch to 8 sublanes

    x_tm = jnp.transpose(x, (1, 0, 2))                       # (S, B, Din)
    x_tm = jnp.pad(x_tm, ((0, 0), (0, Bp - B), (0, Dp - Din)))
    x_flat = x_tm.reshape(S * Bp, Dp)

    # PyTorch h0/c0 layout: (2L, B, H), index 2l = fwd, 2l+1 = rev of layer l.
    h0r = jnp.pad(h0.reshape(L, 2, B, H),
                  ((0, 0), (0, 0), (0, Bp - B), (0, 0))).reshape(L, 2 * Bp, H)
    c0r = jnp.pad(c0.reshape(L, 2, B, H),
                  ((0, 0), (0, 0), (0, Bp - B), (0, 0))).reshape(L, 2 * Bp, H)

    weight_args = []
    for l in range(L):
        weight_args.extend(params["lstm"][l])     # wx_l, whh_l, b_l

    kernel = _make_atlstm_kernel(S, H, L, Bp, int(dd))
    out = pl.pallas_call(
        kernel,
        out_shape=jax.ShapeDtypeStruct((Bp, 1), jnp.float32),
        scratch_shapes=[
            pltpu.VMEM((S * Bp, 8 * H), jnp.float32),   # gx (current layer)
            pltpu.VMEM((S * Bp, H), jnp.bfloat16),      # layer out fwd (ping)
            pltpu.VMEM((S * Bp, H), jnp.bfloat16),      # layer out rev (ping)
            pltpu.VMEM((S * Bp, H), jnp.bfloat16),      # layer out fwd (pong)
            pltpu.VMEM((S * Bp, H), jnp.bfloat16),      # layer out rev (pong)
        ],
        compiler_params=pltpu.CompilerParams(
            vmem_limit_bytes=32 * 1024 * 1024),
    )(x_flat, h0r, c0r, *weight_args, params["fc_w"], params["fc_b"])
    return out[:B]


# ----------------------------------------------------------------------------
# Deterministic parameter construction (PyTorch-style uniform(-1/sqrt(H), ..)),
# stored pre-transposed / pre-fused for the kernel above.
# ----------------------------------------------------------------------------
def make_params(key, input_size, hidden_size, num_layer):
    H = hidden_size
    stdv = 1.0 / math.sqrt(H)
    layers = []
    for l in range(num_layer):
        d_in = input_size if l == 0 else 2 * H
        d_in_p = _round_up(d_in, 8)
        w_ih, w_hh, bias = [], [], []
        for _d in range(2):                  # 0 = forward, 1 = reverse
            key, k1, k2, k3, k4 = jax.random.split(key, 5)
            w = jax.random.uniform(k1, (d_in, 4 * H), jnp.float32, -stdv, stdv)
            w_ih.append(jnp.pad(w, ((0, d_in_p - d_in), (0, 0))))
            w_hh.append(jax.random.uniform(k2, (H, 4 * H), jnp.float32, -stdv, stdv))
            b_ih = jax.random.uniform(k3, (4 * H,), jnp.float32, -stdv, stdv)
            b_hh = jax.random.uniform(k4, (4 * H,), jnp.float32, -stdv, stdv)
            bias.append(b_ih + b_hh)
        # Columns [0:4H] fwd gates (i,f,g,o), [4H:8H] rev gates.
        w_x = jnp.concatenate(w_ih, axis=1).astype(jnp.bfloat16)   # (d_in_p, 8H)
        whh = jnp.concatenate(w_hh, axis=1).astype(jnp.bfloat16)   # (H, 8H)
        b = jnp.concatenate(bias).reshape(1, 8 * H)                # f32
        layers.append((w_x, whh, b))

    key, kw, kb = jax.random.split(key, 3)
    fc_stdv = 1.0 / math.sqrt(2 * H)
    fc_w = jax.random.uniform(kw, (1, 2 * H), jnp.float32, -fc_stdv, fc_stdv)
    fc_b = jax.random.uniform(kb, (1, 1), jnp.float32, -fc_stdv, fc_stdv)

    return {"lstm": layers, "fc_w": fc_w, "fc_b": fc_b,
            "num_layer": num_layer, "hidden_size": hidden_size,
            "input_size": input_size}, key


# ----------------------------------------------------------------------------
# Pure-JAX reference (fp32 math on the same bf16-stored weights) for checking.
# ----------------------------------------------------------------------------
def atlstm_reference(x, params, h0, c0, dd):
    B, S, _ = x.shape
    L = params["num_layer"]
    H = params["hidden_size"]
    h0r = h0.reshape(L, 2, B, H)
    c0r = c0.reshape(L, 2, B, H)
    layer_in = x
    for l in range(L):
        wx, whh, b = params["lstm"][l]
        wx = wx.astype(jnp.float32)
        whh = whh.astype(jnp.float32)
        d_l = layer_in.shape[-1]
        gx = jnp.einsum("bsd,dg->bsg", layer_in, wx[:d_l]) + b[0]
        outs = []
        for d in range(2):
            w = whh[:, 4 * H * d:4 * H * (d + 1)]
            gcol = gx[:, :, 4 * H * d:4 * H * (d + 1)]
            h, c = h0r[l, d], c0r[l, d]
            hs = [None] * S
            ts = range(S) if d == 0 else range(S - 1, -1, -1)
            for t in ts:
                g = gcol[:, t] + h @ w
                i = jax.nn.sigmoid(g[:, 0:H])
                f = jax.nn.sigmoid(g[:, H:2 * H])
                gg = jnp.tanh(g[:, 2 * H:3 * H])
                o = jax.nn.sigmoid(g[:, 3 * H:4 * H])
                c = f * c + i * gg
                h = o * jnp.tanh(c)
                hs[t] = h
            outs.append(jnp.stack(hs, axis=1))           # (B, S, H)
        layer_in = jnp.concatenate(outs, axis=-1)        # (B, S, 2H)
    sel = layer_in[:, dd, :]
    return jnp.sum(sel * params["fc_w"], axis=-1, keepdims=True) + params["fc_b"]


if __name__ == "__main__":
    # Small shapes consistent with the module's forward.
    batch = 2
    seq = 8
    input_size = 4
    hidden_size = 32
    num_layer = 2
    dd = 3

    key = jax.random.PRNGKey(0)
    params, key = make_params(key, input_size, hidden_size, num_layer)

    key, kx, kh, kc = jax.random.split(key, 4)
    x = jax.random.normal(kx, (batch, seq, input_size), jnp.float32)
    # type == 1 branch: fp32 random initial states (deterministic here).
    h0 = jax.random.normal(kh, (num_layer * 2, batch, hidden_size), jnp.float32)
    c0 = jax.random.normal(kc, (num_layer * 2, batch, hidden_size), jnp.float32)

    fwd = jax.jit(lambda x_, h0_, c0_: atlstm_forward(x_, params, h0_, c0_, dd))
    y = jax.block_until_ready(fwd(x, h0, c0))
    assert y.shape == (batch, 1)

    # Loose tolerance: kernel uses bf16 matmul inputs with f32 accumulation.
    y_ref = atlstm_reference(x, params, h0, c0, dd)
    assert jnp.allclose(y, y_ref, atol=5e-2), (y, y_ref)

    print("KERNEL_OK")
</pallas_src>

<mosaic_0001>
module attributes {stable_mosaic.version = 11 : i64} {
  func.func @kernel(%arg0: memref<64x8xf32, #tpu.memory_space<vmem>>, %arg1: memref<2x16x32xf32, #tpu.memory_space<vmem>>, %arg2: memref<2x16x32xf32, #tpu.memory_space<vmem>>, %arg3: memref<8x256xbf16, #tpu.memory_space<vmem>>, %arg4: memref<32x256xbf16, #tpu.memory_space<vmem>>, %arg5: memref<1x256xf32, #tpu.memory_space<vmem>>, %arg6: memref<64x256xbf16, #tpu.memory_space<vmem>>, %arg7: memref<32x256xbf16, #tpu.memory_space<vmem>>, %arg8: memref<1x256xf32, #tpu.memory_space<vmem>>, %arg9: memref<1x64xf32, #tpu.memory_space<vmem>>, %arg10: memref<1x1xf32, #tpu.memory_space<vmem>>, %arg11: memref<8x1xf32, #tpu.memory_space<vmem>>, %arg12: memref<64x256xf32, #tpu.memory_space<vmem>>, %arg13: memref<64x32xbf16, #tpu.memory_space<vmem>>, %arg14: memref<64x32xbf16, #tpu.memory_space<vmem>>, %arg15: memref<64x32xbf16, #tpu.memory_space<vmem>>, %arg16: memref<64x32xbf16, #tpu.memory_space<vmem>>) attributes {dimension_semantics = [], scalar_prefetch = 0 : i64, scratch_operands = 5 : i64, tpu.core_type = #tpu.core_type<tc>} {
    %0 = tpu.iota {dimensions = array<i32: 0>} : vector<16x128xi32>
    %c8_i32 = arith.constant 8 : i32
    %1 = vector.broadcast %c8_i32 : i32 to vector<16x128xi32>
    %2 = arith.cmpi slt, %0, %1 : vector<16x128xi32>
    %c0 = arith.constant 0 : index
    %c0_0 = arith.constant 0 : index
    %3 = vector.load %arg3[%c0, %c0_0] : memref<8x256xbf16, #tpu.memory_space<vmem>>, vector<8x256xbf16>
    %c0_1 = arith.constant 0 : index
    %c0_2 = arith.constant 0 : index
    %4 = vector.load %arg4[%c0_1, %c0_2] : memref<32x256xbf16, #tpu.memory_space<vmem>>, vector<32x256xbf16>
    %c0_3 = arith.constant 0 : index
    %c0_4 = arith.constant 0 : index
    %5 = vector.load %arg5[%c0_3, %c0_4] : memref<1x256xf32, #tpu.memory_space<vmem>>, vector<1x256xf32>
    %c0_5 = arith.constant 0 : index
    %c0_6 = arith.constant 0 : index
    %6 = vector.load %arg0[%c0_5, %c0_6] : memref<64x8xf32, #tpu.memory_space<vmem>>, vector<64x8xf32>
    %7 = arith.truncf %6 : vector<64x8xf32> to vector<64x8xbf16>
    %cst = arith.constant dense<0.000000e+00> : vector<64x256xf32>
    %8 = tpu.matmul %7, %3, %cst {dimension_numbers = #tpu.dot_dimension_numbers<[1], [0], [0], [1], [0, 0, 1, 1], [], []>} : vector<64x8xbf16>, vector<8x256xbf16>, vector<64x256xf32> -> vector<64x256xf32>
    %9 = vector.broadcast %5 : vector<1x256xf32> to vector<64x256xf32>
    %10 = arith.addf %8, %9 : vector<64x256xf32>
    %c0_7 = arith.constant 0 : index
    %c0_8 = arith.constant 0 : index
    %11 = vector.load %arg12[%c0_7, %c0_8] : memref<64x256xf32, #tpu.memory_space<vmem>>, vector<64x256xf32>
    tpu.vector_store %arg12[%c0_7, %c0_8], %10 {strides = array<i32>} : memref<64x256xf32, #tpu.memory_space<vmem>>, vector<64x256xf32>,
    %c0_9 = arith.constant 0 : index
    %c0_10 = arith.constant 0 : index
    %c0_11 = arith.constant 0 : index
    %12 = vector.load %arg1[%c0_9, %c0_10, %c0_11] : memref<2x16x32xf32, #tpu.memory_space<vmem>>, vector<1x16x32xf32>
    %13 = vector.shape_cast %12 : vector<1x16x32xf32> to vector<16x32xf32>
    %c0_12 = arith.constant 0 : index
    %c0_13 = arith.constant 0 : index
    %c0_14 = arith.constant 0 : index
    %14 = vector.load %arg2[%c0_12, %c0_13, %c0_14] : memref<2x16x32xf32, #tpu.memory_space<vmem>>, vector<1x16x32xf32>
    %15 = vector.shape_cast %14 : vector<1x16x32xf32> to vector<16x32xf32>
    %16 = arith.truncf %13 : vector<16x32xf32> to vector<16x32xbf16>
    %cst_15 = arith.constant dense<0.000000e+00> : vector<16x256xf32>
    %17 = tpu.matmul %16, %4, %cst_15 {dimension_numbers = #tpu.dot_dimension_numbers<[1], [0], [0], [1], [0, 0, 1, 1], [], []>} : vector<16x32xbf16>, vector<32x256xbf16>, vector<16x256xf32> -> vector<16x256xf32>
    %18 = vector.extract_strided_slice %17 {offsets = [0, 0], sizes = [16, 128], strides = [1, 1]} : vector<16x256xf32> to vector<16x128xf32>
    %19 = vector.extract_strided_slice %17 {offsets = [0, 128], sizes = [16, 128], strides = [1, 1]} : vector<16x256xf32> to vector<16x128xf32>
    %20 = arith.select %2, %18, %19 : vector<16x128xi1>, vector<16x128xf32>
    %c0_16 = arith.constant 0 : index
    %c0_17 = arith.constant 0 : index
    %21 = vector.load %arg12[%c0_16, %c0_17] : memref<64x256xf32, #tpu.memory_space<vmem>>, vector<8x128xf32>
    %c56 = arith.constant 56 : index
    %c128 = arith.constant 128 : index
    %22 = vector.load %arg12[%c56, %c128] : memref<64x256xf32, #tpu.memory_space<vmem>>, vector<8x128xf32>
    %23 = tpu.concatenate %21, %22 in 0 : vector<8x128xf32>, vector<8x128xf32> -> vector<16x128xf32>
    %24 = arith.addf %20, %23 : vector<16x128xf32>
    %25 = arith.negf %24 : vector<16x128xf32>
    %26 = math.exp %25 : vector<16x128xf32>
    %cst_18 = arith.constant 1.000000e+00 : f32
    %27 = vector.broadcast %cst_18 : f32 to vector<16x128xf32>
    %28 = arith.addf %27, %26 : vector<16x128xf32>
    %29 = arith.divf %27, %28 : vector<16x128xf32>
    %30 = vector.extract_strided_slice %29 {offsets = [0, 0], sizes = [16, 32], strides = [1, 1]} : vector<16x128xf32> to vector<16x32xf32>
    %31 = vector.extract_strided_slice %29 {offsets = [0, 32], sizes = [16, 32], strides = [1, 1]} : vector<16x128xf32> to vector<16x32xf32>
    %32 = vector.extract_strided_slice %29 {offsets = [0, 96], sizes = [16, 32], strides = [1, 1]} : vector<16x128xf32> to vector<16x32xf32>
    %33 = vector.extract_strided_slice %24 {offsets = [0, 64], sizes = [16, 32], strides = [1, 1]} : vector<16x128xf32> to vector<16x32xf32>
    %34 = math.tanh %33 : vector<16x32xf32>
    %35 = arith.mulf %31, %15 : vector<16x32xf32>
    %36 = arith.mulf %30, %34 : vector<16x32xf32>
    %37 = arith.addf %35, %36 : vector<16x32xf32>
    %38 = math.tanh %37 : vector<16x32xf32>
    %39 = arith.mulf %32, %38 : vector<16x32xf32>
    %40 = vector.extract_strided_slice %39 {offsets = [0, 0], sizes = [8, 32], strides = [1, 1]} : vector<16x32xf32> to vector<8x32xf32>
    %41 = arith.truncf %40 : vector<8x32xf32> to vector<8x32xbf16>
    %c0_19 = arith.constant 0 : index
    %c0_20 = arith.constant 0 : index
    %42 = vector.load %arg13[%c0_19, %c0_20] : memref<64x32xbf16, #tpu.memory_space<vmem>>, vector<8x32xbf16>
    tpu.vector_store %arg13[%c0_19, %c0_20], %41 {strides = array<i32>} : memref<64x32xbf16, #tpu.memory_space<vmem>>, vector<8x32xbf16>,
    %43 = vector.extract_strided_slice %39 {offsets = [8, 0], sizes = [8, 32], strides = [1, 1]} : vector<16x32xf32> to vector<8x32xf32>
    %44 = arith.truncf %43 : vector<8x32xf32> to vector<8x32xbf16>
    %c56_21 = arith.constant 56 : index
    %c0_22 = arith.constant 0 : index
    %45 = vector.load %arg14[%c56_21, %c0_22] : memref<64x32xbf16, #tpu.memory_space<vmem>>, vector<8x32xbf16>
    tpu.vector_store %arg14[%c56_21, %c0_22], %44 {strides = array<i32>} : memref<64x32xbf16, #tpu.memory_space<vmem>>, vector<8x32xbf16>,
    %46 = arith.truncf %39 : vector<16x32xf32> to vector<16x32xbf16>
    %cst_23 = arith.constant dense<0.000000e+00> : vector<16x256xf32>
    %47 = tpu.matmul %46, %4, %cst_23 {dimension_numbers = #tpu.dot_dimension_numbers<[1], [0], [0], [1], [0, 0, 1, 1], [], []>} : vector<16x32xbf16>, vector<32x256xbf16>, vector<16x256xf32> -> vector<16x256xf32>
    %48 = vector.extract_strided_slice %47 {offsets = [0, 0], sizes = [16, 128], strides = [1, 1]} : vector<16x256xf32> to vector<16x128xf32>
    %49 = vector.extract_strided_slice %47 {offsets = [0, 128], sizes = [16, 128], strides = [1, 1]} : vector<16x256xf32> to vector<16x128xf32>
    %50 = arith.select %2, %48, %49 : vector<16x128xi1>, vector<16x128xf32>
    %c8 = arith.constant 8 : index
    %c0_24 = arith.constant 0 : index
    %51 = vector.load %arg12[%c8, %c0_24] : memref<64x256xf32, #tpu.memory_space<vmem>>, vector<8x128xf32>
    %c48 = arith.constant 48 : index
    %c128_25 = arith.constant 128 : index
    %52 = vector.load %arg12[%c48, %c128_25] : memref<64x256xf32, #tpu.memory_space<vmem>>, vector<8x128xf32>
    %53 = tpu.concatenate %51, %52 in 0 : vector<8x128xf32>, vector<8x128xf32> -> vector<16x128xf32>
    %54 = arith.addf %50, %53 : vector<16x128xf32>
    %55 = arith.negf %54 : vector<16x128xf32>
    %56 = math.exp %55 : vector<16x128xf32>
    %cst_26 = arith.constant 1.000000e+00 : f32
    %57 = vector.broadcast %cst_26 : f32 to vector<16x128xf32>
    %58 = arith.addf %57, %56 : vector<16x128xf32>
    %59 = arith.divf %57, %58 : vector<16x128xf32>
    %60 = vector.extract_strided_slice %59 {offsets = [0, 0], sizes = [16, 32], strides = [1, 1]} : vector<16x128xf32> to vector<16x32xf32>
    %61 = vector.extract_strided_slice %59 {offsets = [0, 32], sizes = [16, 32], strides = [1, 1]} : vector<16x128xf32> to vector<16x32xf32>
    %62 = vector.extract_strided_slice %59 {offsets = [0, 96], sizes = [16, 32], strides = [1, 1]} : vector<16x128xf32> to vector<16x32xf32>
    %63 = vector.extract_strided_slice %54 {offsets = [0, 64], sizes = [16, 32], strides = [1, 1]} : vector<16x128xf32> to vector<16x32xf32>
    %64 = math.tanh %63 : vector<16x32xf32>
    %65 = arith.mulf %61, %37 : vector<16x32xf32>
    %66 = arith.mulf %60, %64 : vector<16x32xf32>
    %67 = arith.addf %65, %66 : vector<16x32xf32>
    %68 = math.tanh %67 : vector<16x32xf32>
    %69 = arith.mulf %62, %68 : vector<16x32xf32>
    %70 = vector.extract_strided_slice %69 {offsets = [0, 0], sizes = [8, 32], strides = [1, 1]} : vector<16x32xf32> to vector<8x32xf32>
    %71 = arith.truncf %70 : vector<8x32xf32> to vector<8x32xbf16>
    %c8_27 = arith.constant 8 : index
    %c0_28 = arith.constant 0 : index
    %72 = vector.load %arg13[%c8_27, %c0_28] : memref<64x32xbf16, #tpu.memory_space<vmem>>, vector<8x32xbf16>
    tpu.vector_store %arg13[%c8_27, %c0_28], %71 {strides = array<i32>} : memref<64x32xbf16, #tpu.memory_space<vmem>>, vector<8x32xbf16>,
    %73 = vector.extract_strided_slice %69 {offsets = [8, 0], sizes = [8, 32], strides = [1, 1]} : vector<16x32xf32> to vector<8x32xf32>
    %74 = arith.truncf %73 : vector<8x32xf32> to vector<8x32xbf16>
    %c48_29 = arith.constant 48 : index
    %c0_30 = arith.constant 0 : index
    %75 = vector.load %arg14[%c48_29, %c0_30] : memref<64x32xbf16, #tpu.memory_space<vmem>>, vector<8x32xbf16>
    tpu.vector_store %arg14[%c48_29, %c0_30], %74 {strides = array<i32>} : memref<64x32xbf16, #tpu.memory_space<vmem>>, vector<8x32xbf16>,
    %76 = arith.truncf %69 : vector<16x32xf32> to vector<16x32xbf16>
    %cst_31 = arith.constant dense<0.000000e+00> : vector<16x256xf32>
    %77 = tpu.matmul %76, %4, %cst_31 {dimension_numbers = #tpu.dot_dimension_numbers<[1], [0], [0], [1], [0, 0, 1, 1], [], []>} : vector<16x32xbf16>, vector<32x256xbf16>, vector<16x256xf32> -> vector<16x256xf32>
    %78 = vector.extract_strided_slice %77 {offsets = [0, 0], sizes = [16, 128], strides = [1, 1]} : vector<16x256xf32> to vector<16x128xf32>
    %79 = vector.extract_strided_slice %77 {offsets = [0, 128], sizes = [16, 128], strides = [1, 1]} : vector<16x256xf32> to vector<16x128xf32>
    %80 = arith.select %2, %78, %79 : vector<16x128xi1>, vector<16x128xf32>
    %c16 = arith.constant 16 : index
    %c0_32 = arith.constant 0 : index
    %81 = vector.load %arg12[%c16, %c0_32] : memref<64x256xf32, #tpu.memory_space<vmem>>, vector<8x128xf32>
    %c40 = arith.constant 40 : index
    %c128_33 = arith.constant 128 : index
    %82 = vector.load %arg12[%c40, %c128_33] : memref<64x256xf32, #tpu.memory_space<vmem>>, vector<8x128xf32>
    %83 = tpu.concatenate %81, %82 in 0 : vector<8x128xf32>, vector<8x128xf32> -> vector<16x128xf32>
    %84 = arith.addf %80, %83 : vector<16x128xf32>
    %85 = arith.negf %84 : vector<16x128xf32>
    %86 = math.exp %85 : vector<16x128xf32>
    %cst_34 = arith.constant 1.000000e+00 : f32
    %87 = vector.broadcast %cst_34 : f32 to vector<16x128xf32>
    %88 = arith.addf %87, %86 : vector<16x128xf32>
    %89 = arith.divf %87, %88 : vector<16x128xf32>
    %90 = vector.extract_strided_slice %89 {offsets = [0, 0], sizes = [16, 32], strides = [1, 1]} : vector<16x128xf32> to vector<16x32xf32>
    %91 = vector.extract_strided_slice %89 {offsets = [0, 32], sizes = [16, 32], strides = [1, 1]} : vector<16x128xf32> to vector<16x32xf32>
    %92 = vector.extract_strided_slice %89 {offsets = [0, 96], sizes = [16, 32], strides = [1, 1]} : vector<16x128xf32> to vector<16x32xf32>
    %93 = vector.extract_strided_slice %84 {offsets = [0, 64], sizes = [16, 32], strides = [1, 1]} : vector<16x128xf32> to vector<16x32xf32>
    %94 = math.tanh %93 : vector<16x32xf32>
    %95 = arith.mulf %91, %67 : vector<16x32xf32>
    %96 = arith.mulf %90, %94 : vector<16x32xf32>
    %97 = arith.addf %95, %96 : vector<16x32xf32>
    %98 = math.tanh %97 : vector<16x32xf32>
    %99 = arith.mulf %92, %98 : vector<16x32xf32>
    %100 = vector.extract_strided_slice %99 {offsets = [0, 0], sizes = [8, 32], strides = [1, 1]} : vector<16x32xf32> to vector<8x32xf32>
    %101 = arith.truncf %100 : vector<8x32xf32> to vector<8x32xbf16>
    %c16_35 = arith.constant 16 : index
    %c0_36 = arith.constant 0 : index
    %102 = vector.load %arg13[%c16_35, %c0_36] : memref<64x32xbf16, #tpu.memory_space<vmem>>, vector<8x32xbf16>
    tpu.vector_store %arg13[%c16_35, %c0_36], %101 {strides = array<i32>} : memref<64x32xbf16, #tpu.memory_space<vmem>>, vector<8x32xbf16>,
    %103 = vector.extract_strided_slice %99 {offsets = [8, 0], sizes = [8, 32], strides = [1, 1]} : vector<16x32xf32> to vector<8x32xf32>
    %104 = arith.truncf %103 : vector<8x32xf32> to vector<8x32xbf16>
    %c40_37 = arith.constant 40 : index
    %c0_38 = arith.constant 0 : index
    %105 = vector.load %arg14[%c40_37, %c0_38] : memref<64x32xbf16, #tpu.memory_space<vmem>>, vector<8x32xbf16>
    tpu.vector_store %arg14[%c40_37, %c0_38], %104 {strides = array<i32>} : memref<64x32xbf16, #tpu.memory_space<vmem>>, vector<8x32xbf16>,
    %106 = arith.truncf %99 : vector<16x32xf32> to vector<16x32xbf16>
    %cst_39 = arith.constant dense<0.000000e+00> : vector<16x256xf32>
    %107 = tpu.matmul %106, %4, %cst_39 {dimension_numbers = #tpu.dot_dimension_numbers<[1], [0], [0], [1], [0, 0, 1, 1], [], []>} : vector<16x32xbf16>, vector<32x256xbf16>, vector<16x256xf32> -> vector<16x256xf32>
    %108 = vector.extract_strided_slice %107 {offsets = [0, 0], sizes = [16, 128], strides = [1, 1]} : vector<16x256xf32> to vector<16x128xf32>
    %109 = vector.extract_strided_slice %107 {offsets = [0, 128], sizes = [16, 128], strides = [1, 1]} : vector<16x256xf32> to vector<16x128xf32>
    %110 = arith.select %2, %108, %109 : vector<16x128xi1>, vector<16x128xf32>
    %c24 = arith.constant 24 : index
    %c0_40 = arith.constant 0 : index
    %111 = vector.load %arg12[%c24, %c0_40] : memref<64x256xf32, #tpu.memory_space<vmem>>, vector<8x128xf32>
    %c32 = arith.constant 32 : index
    %c128_41 = arith.constant 128 : index
    %112 = vector.load %arg12[%c32, %c128_41] : memref<64x256xf32, #tpu.memory_space<vmem>>, vector<8x128xf32>
    %113 = tpu.concatenate %111, %112 in 0 : vector<8x128xf32>, vector<8x128xf32> -> vector<16x128xf32>
    %114 = arith.addf %110, %113 : vector<16x128xf32>
    %115 = arith.negf %114 : vector<16x128xf32>
    %116 = math.exp %115 : vector<16x128xf32>
    %cst_42 = arith.constant 1.000000e+00 : f32
    %117 = vector.broadcast %cst_42 : f32 to vector<16x128xf32>
    %118 = arith.addf %117, %116 : vector<16x128xf32>
    %119 = arith.divf %117, %118 : vector<16x128xf32>
    %120 = vector.extract_strided_slice %119 {offsets = [0, 0], sizes = [16, 32], strides = [1, 1]} : vector<16x128xf32> to vector<16x32xf32>
    %121 = vector.extract_strided_slice %119 {offsets = [0, 32], sizes = [16, 32], strides = [1, 1]} : vector<16x128xf32> to vector<16x32xf32>
    %122 = vector.extract_strided_slice %119 {offsets = [0, 96], sizes = [16, 32], strides = [1, 1]} : vector<16x128xf32> to vector<16x32xf32>
    %123 = vector.extract_strided_slice %114 {offsets = [0, 64], sizes = [16, 32], strides = [1, 1]} : vector<16x128xf32> to vector<16x32xf32>
    %124 = math.tanh %123 : vector<16x32xf32>
    %125 = arith.mulf %121, %97 : vector<16x32xf32>
    %126 = arith.mulf %120, %124 : vector<16x32xf32>
    %127 = arith.addf %125, %126 : vector<16x32xf32>
    %128 = math.tanh %127 : vector<16x32xf32>
    %129 = arith.mulf %122, %128 : vector<16x32xf32>
    %130 = vector.extract_strided_slice %129 {offsets = [0, 0], sizes = [8, 32], strides = [1, 1]} : vector<16x32xf32> to vector<8x32xf32>
    %131 = arith.truncf %130 : vector<8x32xf32> to vector<8x32xbf16>
    %c24_43 = arith.constant 24 : index
    %c0_44 = arith.constant 0 : index
    %132 = vector.load %arg13[%c24_43, %c0_44] : memref<64x32xbf16, #tpu.memory_space<vmem>>, vector<8x32xbf16>
    tpu.vector_store %arg13[%c24_43, %c0_44], %131 {strides = array<i32>} : memref<64x32xbf16, #tpu.memory_space<vmem>>, vector<8x32xbf16>,
    %133 = vector.extract_strided_slice %129 {offsets = [8, 0], sizes = [8, 32], strides = [1, 1]} : vector<16x32xf32> to vector<8x32xf32>
    %134 = arith.truncf %133 : vector<8x32xf32> to vector<8x32xbf16>
    %c32_45 = arith.constant 32 : index
    %c0_46 = arith.constant 0 : index
    %135 = vector.load %arg14[%c32_45, %c0_46] : memref<64x32xbf16, #tpu.memory_space<vmem>>, vector<8x32xbf16>
    tpu.vector_store %arg14[%c32_45, %c0_46], %134 {strides = array<i32>} : memref<64x32xbf16, #tpu.memory_space<vmem>>, vector<8x32xbf16>,
    %136 = arith.truncf %129 : vector<16x32xf32> to vector<16x32xbf16>
    %cst_47 = arith.constant dense<0.000000e+00> : vector<16x256xf32>
    %137 = tpu.matmul %136, %4, %cst_47 {dimension_numbers = #tpu.dot_dimension_numbers<[1], [0], [0], [1], [0, 0, 1, 1], [], []>} : vector<16x32xbf16>, vector<32x256xbf16>, vector<16x256xf32> -> vector<16x256xf32>
    %138 = vector.extract_strided_slice %137 {offsets = [0, 0], sizes = [16, 128], strides = [1, 1]} : vector<16x256xf32> to vector<16x128xf32>
    %139 = vector.extract_strided_slice %137 {offsets = [0, 128], sizes = [16, 128], strides = [1, 1]} : vector<16x256xf32> to vector<16x128xf32>
    %140 = arith.select %2, %138, %139 : vector<16x128xi1>, vector<16x128xf32>
    %c32_48 = arith.constant 32 : index
    %c0_49 = arith.constant 0 : index
    %141 = vector.load %arg12[%c32_48, %c0_49] : memref<64x256xf32, #tpu.memory_space<vmem>>, vector<8x128xf32>
    %c24_50 = arith.constant 24 : index
    %c128_51 = arith.constant 128 : index
    %142 = vector.load %arg12[%c24_50, %c128_51] : memref<64x256xf32, #tpu.memory_space<vmem>>, vector<8x128xf32>
    %143 = tpu.concatenate %141, %142 in 0 : vector<8x128xf32>, vector<8x128xf32> -> vector<16x128xf32>
    %144 = arith.addf %140, %143 : vector<16x128xf32>
    %145 = arith.negf %144 : vector<16x128xf32>
    %146 = math.exp %145 : vector<16x128xf32>
    %cst_52 = arith.constant 1.000000e+00 : f32
    %147 = vector.broadcast %cst_52 : f32 to vector<16x128xf32>
    %148 = arith.addf %147, %146 : vector<16x128xf32>
    %149 = arith.divf %147, %148 : vector<16x128xf32>
    %150 = vector.extract_strided_slice %149 {offsets = [0, 0], sizes = [16, 32], strides = [1, 1]} : vector<16x128xf32> to vector<16x32xf32>
    %151 = vector.extract_strided_slice %149 {offsets = [0, 32], sizes = [16, 32], strides = [1, 1]} : vector<16x128xf32> to vector<16x32xf32>
    %152 = vector.extract_strided_slice %149 {offsets = [0, 96], sizes = [16, 32], strides = [1, 1]} : vector<16x128xf32> to vector<16x32xf32>
    %153 = vector.extract_strided_slice %144 {offsets = [0, 64], sizes = [16, 32], strides = [1, 1]} : vector<16x128xf32> to vector<16x32xf32>
    %154 = math.tanh %153 : vector<16x32xf32>
    %155 = arith.mulf %151, %127 : vector<16x32xf32>
    %156 = arith.mulf %150, %154 : vector<16x32xf32>
    %157 = arith.addf %155, %156 : vector<16x32xf32>
    %158 = math.tanh %157 : vector<16x32xf32>
    %159 = arith.mulf %152, %158 : vector<16x32xf32>
    %160 = vector.extract_strided_slice %159 {offsets = [0, 0], sizes = [8, 32], strides = [1, 1]} : vector<16x32xf32> to vector<8x32xf32>
    %161 = arith.truncf %160 : vector<8x32xf32> to vector<8x32xbf16>
    %c32_53 = arith.constant 32 : index
    %c0_54 = arith.constant 0 : index
    %162 = vector.load %arg13[%c32_53, %c0_54] : memref<64x32xbf16, #tpu.memory_space<vmem>>, vector<8x32xbf16>
    tpu.vector_store %arg13[%c32_53, %c0_54], %161 {strides = array<i32>} : memref<64x32xbf16, #tpu.memory_space<vmem>>, vector<8x32xbf16>,
    %163 = vector.extract_strided_slice %159 {offsets = [8, 0], sizes = [8, 32], strides = [1, 1]} : vector<16x32xf32> to vector<8x32xf32>
    %164 = arith.truncf %163 : vector<8x32xf32> to vector<8x32xbf16>
    %c24_55 = arith.constant 24 : index
    %c0_56 = arith.constant 0 : index
    %165 = vector.load %arg14[%c24_55, %c0_56] : memref<64x32xbf16, #tpu.memory_space<vmem>>, vector<8x32xbf16>
    tpu.vector_store %arg14[%c24_55, %c0_56], %164 {strides = array<i32>} : memref<64x32xbf16, #tpu.memory_space<vmem>>, vector<8x32xbf16>,
    %166 = arith.truncf %159 : vector<16x32xf32> to vector<16x32xbf16>
    %cst_57 = arith.constant dense<0.000000e+00> : vector<16x256xf32>
    %167 = tpu.matmul %166, %4, %cst_57 {dimension_numbers = #tpu.dot_dimension_numbers<[1], [0], [0], [1], [0, 0, 1, 1], [], []>} : vector<16x32xbf16>, vector<32x256xbf16>, vector<16x256xf32> -> vector<16x256xf32>
    %168 = vector.extract_strided_slice %167 {offsets = [0, 0], sizes = [16, 128], strides = [1, 1]} : vector<16x256xf32> to vector<16x128xf32>
    %169 = vector.extract_strided_slice %167 {offsets = [0, 128], sizes = [16, 128], strides = [1, 1]} : vector<16x256xf32> to vector<16x128xf32>
    %170 = arith.select %2, %168, %169 : vector<16x128xi1>, vector<16x128xf32>
    %c40_58 = arith.constant 40 : index
    %c0_59 = arith.constant 0 : index
    %171 = vector.load %arg12[%c40_58, %c0_59] : memref<64x256xf32, #tpu.memory_space<vmem>>, vector<8x128xf32>
    %c16_60 = arith.constant 16 : index
    %c128_61 = arith.constant 128 : index
    %172 = vector.load %arg12[%c16_60, %c128_61] : memref<64x256xf32, #tpu.memory_space<vmem>>, vector<8x128xf32>
    %173 = tpu.concatenate %171, %172 in 0 : vector<8x128xf32>, vector<8x128xf32> -> vector<16x128xf32>
    %174 = arith.addf %170, %173 : vector<16x128xf32>
    %175 = arith.negf %174 : vector<16x128xf32>
    %176 = math.exp %175 : vector<16x128xf32>
    %cst_62 = arith.constant 1.000000e+00 : f32
    %177 = vector.broadcast %cst_62 : f32 to vector<16x128xf32>
    %178 = arith.addf %177, %176 : vector<16x128xf32>
    %179 = arith.divf %177, %178 : vector<16x128xf32>
    %180 = vector.extract_strided_slice %179 {offsets = [0, 0], sizes = [16, 32], strides = [1, 1]} : vector<16x128xf32> to vector<16x32xf32>
    %181 = vector.extract_strided_slice %179 {offsets = [0, 32], sizes = [16, 32], strides = [1, 1]} : vector<16x128xf32> to vector<16x32xf32>
    %182 = vector.extract_strided_slice %179 {offsets = [0, 96], sizes = [16, 32], strides = [1, 1]} : vector<16x128xf32> to vector<16x32xf32>
    %183 = vector.extract_strided_slice %174 {offsets = [0, 64], sizes = [16, 32], strides = [1, 1]} : vector<16x128xf32> to vector<16x32xf32>
    %184 = math.tanh %183 : vector<16x32xf32>
    %185 = arith.mulf %181, %157 : vector<16x32xf32>
    %186 = arith.mulf %180, %184 : vector<16x32xf32>
    %187 = arith.addf %185, %186 : vector<16x32xf32>
    %188 = math.tanh %187 : vector<16x32xf32>
    %189 = arith.mulf %182, %188 : vector<16x32xf32>
    %190 = vector.extract_strided_slice %189 {offsets = [0, 0], sizes = [8, 32], strides = [1, 1]} : vector<16x32xf32> to vector<8x32xf32>
    %191 = arith.truncf %190 : vector<8x32xf32> to vector<8x32xbf16>
    %c40_63 = arith.constant 40 : index
    %c0_64 = arith.constant 0 : index
    %192 = vector.load %arg13[%c40_63, %c0_64] : memref<64x32xbf16, #tpu.memory_space<vmem>>, vector<8x32xbf16>
    tpu.vector_store %arg13[%c40_63, %c0_64], %191 {strides = array<i32>} : memref<64x32xbf16, #tpu.memory_space<vmem>>, vector<8x32xbf16>,
    %193 = vector.extract_strided_slice %189 {offsets = [8, 0], sizes = [8, 32], strides = [1, 1]} : vector<16x32xf32> to vector<8x32xf32>
    %194 = arith.truncf %193 : vector<8x32xf32> to vector<8x32xbf16>
    %c16_65 = arith.constant 16 : index
    %c0_66 = arith.constant 0 : index
    %195 = vector.load %arg14[%c16_65, %c0_66] : memref<64x32xbf16, #tpu.memory_space<vmem>>, vector<8x32xbf16>
    tpu.vector_store %arg14[%c16_65, %c0_66], %194 {strides = array<i32>} : memref<64x32xbf16, #tpu.memory_space<vmem>>, vector<8x32xbf16>,
    %196 = arith.truncf %189 : vector<16x32xf32> to vector<16x32xbf16>
    %cst_67 = arith.constant dense<0.000000e+00> : vector<16x256xf32>
    %197 = tpu.matmul %196, %4, %cst_67 {dimension_numbers = #tpu.dot_dimension_numbers<[1], [0], [0], [1], [0, 0, 1, 1], [], []>} : vector<16x32xbf16>, vector<32x256xbf16>, vector<16x256xf32> -> vector<16x256xf32>
    %198 = vector.extract_strided_slice %197 {offsets = [0, 0], sizes = [16, 128], strides = [1, 1]} : vector<16x256xf32> to vector<16x128xf32>
    %199 = vector.extract_strided_slice %197 {offsets = [0, 128], sizes = [16, 128], strides = [1, 1]} : vector<16x256xf32> to vector<16x128xf32>
    %200 = arith.select %2, %198, %199 : vector<16x128xi1>, vector<16x128xf32>
    %c48_68 = arith.constant 48 : index
    %c0_69 = arith.constant 0 : index
    %201 = vector.load %arg12[%c48_68, %c0_69] : memref<64x256xf32, #tpu.memory_space<vmem>>, vector<8x128xf32>
    %c8_70 = arith.constant 8 : index
    %c128_71 = arith.constant 128 : index
    %202 = vector.load %arg12[%c8_70, %c128_71] : memref<64x256xf32, #tpu.memory_space<vmem>>, vector<8x128xf32>
    %203 = tpu.concatenate %201, %202 in 0 : vector<8x128xf32>, vector<8x128xf32> -> vector<16x128xf32>
    %204 = arith.addf %200, %203 : vector<16x128xf32>
    %205 = arith.negf %204 : vector<16x128xf32>
    %206 = math.exp %205 : vector<16x128xf32>
    %cst_72 = arith.constant 1.000000e+00 : f32
    %207 = vector.broadcast %cst_72 : f32 to vector<16x128xf32>
    %208 = arith.addf %207, %206 : vector<16x128xf32>
    %209 = arith.divf %207, %208 : vector<16x128xf32>
    %210 = vector.extract_strided_slice %209 {offsets = [0, 0], sizes = [16, 32], strides = [1, 1]} : vector<16x128xf32> to vector<16x32xf32>
    %211 = vector.extract_strided_slice %209 {offsets = [0, 32], sizes = [16, 32], strides = [1, 1]} : vector<16x128xf32> to vector<16x32xf32>
    %212 = vector.extract_strided_slice %209 {offsets = [0, 96], sizes = [16, 32], strides = [1, 1]} : vector<16x128xf32> to vector<16x32xf32>
    %213 = vector.extract_strided_slice %204 {offsets = [0, 64], sizes = [16, 32], strides = [1, 1]} : vector<16x128xf32> to vector<16x32xf32>
    %214 = math.tanh %213 : vector<16x32xf32>
    %215 = arith.mulf %211, %187 : vector<16x32xf32>
    %216 = arith.mulf %210, %214 : vector<16x32xf32>
    %217 = arith.addf %215, %216 : vector<16x32xf32>
    %218 = math.tanh %217 : vector<16x32xf32>
    %219 = arith.mulf %212, %218 : vector<16x32xf32>
    %220 = vector.extract_strided_slice %219 {offsets = [0, 0], sizes = [8, 32], strides = [1, 1]} : vector<16x32xf32> to vector<8x32xf32>
    %221 = arith.truncf %220 : vector<8x32xf32> to vector<8x32xbf16>
    %c48_73 = arith.constant 48 : index
    %c0_74 = arith.constant 0 : index
    %222 = vector.load %arg13[%c48_73, %c0_74] : memref<64x32xbf16, #tpu.memory_space<vmem>>, vector<8x32xbf16>
    tpu.vector_store %arg13[%c48_73, %c0_74], %221 {strides = array<i32>} : memref<64x32xbf16, #tpu.memory_space<vmem>>, vector<8x32xbf16>,
    %223 = vector.extract_strided_slice %219 {offsets = [8, 0], sizes = [8, 32], strides = [1, 1]} : vector<16x32xf32> to vector<8x32xf32>
    %224 = arith.truncf %223 : vector<8x32xf32> to vector<8x32xbf16>
    %c8_75 = arith.constant 8 : index
    %c0_76 = arith.constant 0 : index
    %225 = vector.load %arg14[%c8_75, %c0_76] : memref<64x32xbf16, #tpu.memory_space<vmem>>, vector<8x32xbf16>
    tpu.vector_store %arg14[%c8_75, %c0_76], %224 {strides = array<i32>} : memref<64x32xbf16, #tpu.memory_space<vmem>>, vector<8x32xbf16>,
    %226 = arith.truncf %219 : vector<16x32xf32> to vector<16x32xbf16>
    %cst_77 = arith.constant dense<0.000000e+00> : vector<16x256xf32>
    %227 = tpu.matmul %226, %4, %cst_77 {dimension_numbers = #tpu.dot_dimension_numbers<[1], [0], [0], [1], [0, 0, 1, 1], [], []>} : vector<16x32xbf16>, vector<32x256xbf16>, vector<16x256xf32> -> vector<16x256xf32>
    %228 = vector.extract_strided_slice %227 {offsets = [0, 0], sizes = [16, 128], strides = [1, 1]} : vector<16x256xf32> to vector<16x128xf32>
    %229 = vector.extract_strided_slice %227 {offsets = [0, 128], sizes = [16, 128], strides = [1, 1]} : vector<16x256xf32> to vector<16x128xf32>
    %230 = arith.select %2, %228, %229 : vector<16x128xi1>, vector<16x128xf32>
    %c56_78 = arith.constant 56 : index
    %c0_79 = arith.constant 0 : index
    %231 = vector.load %arg12[%c56_78, %c0_79] : memref<64x256xf32, #tpu.memory_space<vmem>>, vector<8x128xf32>
    %c0_80 = arith.constant 0 : index
    %c128_81 = arith.constant 128 : index
    %232 = vector.load %arg12[%c0_80, %c128_81] : memref<64x256xf32, #tpu.memory_space<vmem>>, vector<8x128xf32>
    %233 = tpu.concatenate %231, %232 in 0 : vector<8x128xf32>, vector<8x128xf32> -> vector<16x128xf32>
    %234 = arith.addf %230, %233 : vector<16x128xf32>
    %235 = arith.negf %234 : vector<16x128xf32>
    %236 = math.exp %235 : vector<16x128xf32>
    %cst_82 = arith.constant 1.000000e+00 : f32
    %237 = vector.broadcast %cst_82 : f32 to vector<16x128xf32>
    %238 = arith.addf %237, %236 : vector<16x128xf32>
    %239 = arith.divf %237, %238 : vector<16x128xf32>
    %240 = vector.extract_strided_slice %239 {offsets = [0, 0], sizes = [16, 32], strides = [1, 1]} : vector<16x128xf32> to vector<16x32xf32>
    %241 = vector.extract_strided_slice %239 {offsets = [0, 32], sizes = [16, 32], strides = [1, 1]} : vector<16x128xf32> to vector<16x32xf32>
    %242 = vector.extract_strided_slice %239 {offsets = [0, 96], sizes = [16, 32], strides = [1, 1]} : vector<16x128xf32> to vector<16x32xf32>
    %243 = vector.extract_strided_slice %234 {offsets = [0, 64], sizes = [16, 32], strides = [1, 1]} : vector<16x128xf32> to vector<16x32xf32>
    %244 = math.tanh %243 : vector<16x32xf32>
    %245 = arith.mulf %241, %217 : vector<16x32xf32>
    %246 = arith.mulf %240, %244 : vector<16x32xf32>
    %247 = arith.addf %245, %246 : vector<16x32xf32>
    %248 = math.tanh %247 : vector<16x32xf32>
    %249 = arith.mulf %242, %248 : vector<16x32xf32>
    %250 = vector.extract_strided_slice %249 {offsets = [0, 0], sizes = [8, 32], strides = [1, 1]} : vector<16x32xf32> to vector<8x32xf32>
    %251 = arith.truncf %250 : vector<8x32xf32> to vector<8x32xbf16>
    %c56_83 = arith.constant 56 : index
    %c0_84 = arith.constant 0 : index
    %252 = vector.load %arg13[%c56_83, %c0_84] : memref<64x32xbf16, #tpu.memory_space<vmem>>, vector<8x32xbf16>
    tpu.vector_store %arg13[%c56_83, %c0_84], %251 {strides = array<i32>} : memref<64x32xbf16, #tpu.memory_space<vmem>>, vector<8x32xbf16>,
    %253 = vector.extract_strided_slice %249 {offsets = [8, 0], sizes = [8, 32], strides = [1, 1]} : vector<16x32xf32> to vector<8x32xf32>
    %254 = arith.truncf %253 : vector<8x32xf32> to vector<8x32xbf16>
    %c0_85 = arith.constant 0 : index
    %c0_86 = arith.constant 0 : index
    %255 = vector.load %arg14[%c0_85, %c0_86] : memref<64x32xbf16, #tpu.memory_space<vmem>>, vector<8x32xbf16>
    tpu.vector_store %arg14[%c0_85, %c0_86], %254 {strides = array<i32>} : memref<64x32xbf16, #tpu.memory_space<vmem>>, vector<8x32xbf16>,
    %c0_87 = arith.constant 0 : index
    %c0_88 = arith.constant 0 : index
    %256 = vector.load %arg6[%c0_87, %c0_88] : memref<64x256xbf16, #tpu.memory_space<vmem>>, vector<64x256xbf16>
    %c0_89 = arith.constant 0 : index
    %c0_90 = arith.constant 0 : index
    %257 = vector.load %arg7[%c0_89, %c0_90] : memref<32x256xbf16, #tpu.memory_space<vmem>>, vector<32x256xbf16>
    %c0_91 = arith.constant 0 : index
    %c0_92 = arith.constant 0 : index
    %258 = vector.load %arg8[%c0_91, %c0_92] : memref<1x256xf32, #tpu.memory_space<vmem>>, vector<1x256xf32>
    %c0_93 = arith.constant 0 : index
    %c0_94 = arith.constant 0 : index
    %259 = vector.load %arg13[%c0_93, %c0_94] : memref<64x32xbf16, #tpu.memory_space<vmem>>, vector<64x32xbf16>
    %c0_95 = arith.constant 0 : index
    %c0_96 = arith.constant 0 : index
    %260 = vector.load %arg14[%c0_95, %c0_96] : memref<64x32xbf16, #tpu.memory_space<vmem>>, vector<64x32xbf16>
    %261 = vector.extract_strided_slice %256 {offsets = [0, 0], sizes = [32, 256], strides = [1, 1]} : vector<64x256xbf16> to vector<32x256xbf16>
    %cst_97 = arith.constant dense<0.000000e+00> : vector<64x256xf32>
    %262 = tpu.matmul %259, %261, %cst_97 {dimension_numbers = #tpu.dot_dimension_numbers<[1], [0], [0], [1], [0, 0, 1, 1], [], []>} : vector<64x32xbf16>, vector<32x256xbf16>, vector<64x256xf32> -> vector<64x256xf32>
    %263 = vector.extract_strided_slice %256 {offsets = [32, 0], sizes = [32, 256], strides = [1, 1]} : vector<64x256xbf16> to vector<32x256xbf16>
    %cst_98 = arith.constant dense<0.000000e+00> : vector<64x256xf32>
    %264 = tpu.matmul %260, %263, %cst_98 {dimension_numbers = #tpu.dot_dimension_numbers<[1], [0], [0], [1], [0, 0, 1, 1], [], []>} : vector<64x32xbf16>, vector<32x256xbf16>, vector<64x256xf32> -> vector<64x256xf32>
    %265 = arith.addf %262, %264 : vector<64x256xf32>
    %266 = vector.broadcast %258 : vector<1x256xf32> to vector<64x256xf32>
    %267 = arith.addf %265, %266 : vector<64x256xf32>
    %c0_99 = arith.constant 0 : index
    %c0_100 = arith.constant 0 : index
    %268 = vector.load %arg12[%c0_99, %c0_100] : memref<64x256xf32, #tpu.memory_space<vmem>>, vector<64x256xf32>
    tpu.vector_store %arg12[%c0_99, %c0_100], %267 {strides = array<i32>} : memref<64x256xf32, #tpu.memory_space<vmem>>, vector<64x256xf32>,
    %c1 = arith.constant 1 : index
    %c0_101 = arith.constant 0 : index
    %c0_102 = arith.constant 0 : index
    %269 = vector.load %arg1[%c1, %c0_101, %c0_102] : memref<2x16x32xf32, #tpu.memory_space<vmem>>, vector<1x16x32xf32>
    %270 = vector.shape_cast %269 : vector<1x16x32xf32> to vector<16x32xf32>
    %c1_103 = arith.constant 1 : index
    %c0_104 = arith.constant 0 : index
    %c0_105 = arith.constant 0 : index
    %271 = vector.load %arg2[%c1_103, %c0_104, %c0_105] : memref<2x16x32xf32, #tpu.memory_space<vmem>>, vector<1x16x32xf32>
    %272 = vector.shape_cast %271 : vector<1x16x32xf32> to vector<16x32xf32>
    %273 = arith.truncf %270 : vector<16x32xf32> to vector<16x32xbf16>
    %cst_106 = arith.constant dense<0.000000e+00> : vector<16x256xf32>
    %274 = tpu.matmul %273, %257, %cst_106 {dimension_numbers = #tpu.dot_dimension_numbers<[1], [0], [0], [1], [0, 0, 1, 1], [], []>} : vector<16x32xbf16>, vector<32x256xbf16>, vector<16x256xf32> -> vector<16x256xf32>
    %275 = vector.extract_strided_slice %274 {offsets = [0, 0], sizes = [16, 128], strides = [1, 1]} : vector<16x256xf32> to vector<16x128xf32>
    %276 = vector.extract_strided_slice %274 {offsets = [0, 128], sizes = [16, 128], strides = [1, 1]} : vector<16x256xf32> to vector<16x128xf32>
    %277 = arith.select %2, %275, %276 : vector<16x128xi1>, vector<16x128xf32>
    %c0_107 = arith.constant 0 : index
    %c0_108 = arith.constant 0 : index
    %278 = vector.load %arg12[%c0_107, %c0_108] : memref<64x256xf32, #tpu.memory_space<vmem>>, vector<8x128xf32>
    %c56_109 = arith.constant 56 : index
    %c128_110 = arith.constant 128 : index
    %279 = vector.load %arg12[%c56_109, %c128_110] : memref<64x256xf32, #tpu.memory_space<vmem>>, vector<8x128xf32>
    %280 = tpu.concatenate %278, %279 in 0 : vector<8x128xf32>, vector<8x128xf32> -> vector<16x128xf32>
    %281 = arith.addf %277, %280 : vector<16x128xf32>
    %282 = arith.negf %281 : vector<16x128xf32>
    %283 = math.exp %282 : vector<16x128xf32>
    %cst_111 = arith.constant 1.000000e+00 : f32
    %284 = vector.broadcast %cst_111 : f32 to vector<16x128xf32>
    %285 = arith.addf %284, %283 : vector<16x128xf32>
    %286 = arith.divf %284, %285 : vector<16x128xf32>
    %287 = vector.extract_strided_slice %286 {offsets = [0, 0], sizes = [16, 32], strides = [1, 1]} : vector<16x128xf32> to vector<16x32xf32>
    %288 = vector.extract_strided_slice %286 {offsets = [0, 32], sizes = [16, 32], strides = [1, 1]} : vector<16x128xf32> to vector<16x32xf32>
    %289 = vector.extract_strided_slice %286 {offsets = [0, 96], sizes = [16, 32], strides = [1, 1]} : vector<16x128xf32> to vector<16x32xf32>
    %290 = vector.extract_strided_slice %281 {offsets = [0, 64], sizes = [16, 32], strides = [1, 1]} : vector<16x128xf32> to vector<16x32xf32>
    %291 = math.tanh %290 : vector<16x32xf32>
    %292 = arith.mulf %288, %272 : vector<16x32xf32>
    %293 = arith.mulf %287, %291 : vector<16x32xf32>
    %294 = arith.addf %292, %293 : vector<16x32xf32>
    %295 = math.tanh %294 : vector<16x32xf32>
    %296 = arith.mulf %289, %295 : vector<16x32xf32>
    %297 = arith.truncf %296 : vector<16x32xf32> to vector<16x32xbf16>
    %cst_112 = arith.constant dense<0.000000e+00> : vector<16x256xf32>
    %298 = tpu.matmul %297, %257, %cst_112 {dimension_numbers = #tpu.dot_dimension_numbers<[1], [0], [0], [1], [0, 0, 1, 1], [], []>} : vector<16x32xbf16>, vector<32x256xbf16>, vector<16x256xf32> -> vector<16x256xf32>
    %299 = vector.extract_strided_slice %298 {offsets = [0, 0], sizes = [16, 128], strides = [1, 1]} : vector<16x256xf32> to vector<16x128xf32>
    %300 = vector.extract_strided_slice %298 {offsets = [0, 128], sizes = [16, 128], strides = [1, 1]} : vector<16x256xf32> to vector<16x128xf32>
    %301 = arith.select %2, %299, %300 : vector<16x128xi1>, vector<16x128xf32>
    %c8_113 = arith.constant 8 : index
    %c0_114 = arith.constant 0 : index
    %302 = vector.load %arg12[%c8_113, %c0_114] : memref<64x256xf32, #tpu.memory_space<vmem>>, vector<8x128xf32>
    %c48_115 = arith.constant 48 : index
    %c128_116 = arith.constant 128 : index
    %303 = vector.load %arg12[%c48_115, %c128_116] : memref<64x256xf32, #tpu.memory_space<vmem>>, vector<8x128xf32>
    %304 = tpu.concatenate %302, %303 in 0 : vector<8x128xf32>, vector<8x128xf32> -> vector<16x128xf32>
    %305 = arith.addf %301, %304 : vector<16x128xf32>
    %306 = arith.negf %305 : vector<16x128xf32>
    %307 = math.exp %306 : vector<16x128xf32>
    %cst_117 = arith.constant 1.000000e+00 : f32
    %308 = vector.broadcast %cst_117 : f32 to vector<16x128xf32>
    %309 = arith.addf %308, %307 : vector<16x128xf32>
    %310 = arith.divf %308, %309 : vector<16x128xf32>
    %311 = vector.extract_strided_slice %310 {offsets = [0, 0], sizes = [16, 32], strides = [1, 1]} : vector<16x128xf32> to vector<16x32xf32>
    %312 = vector.extract_strided_slice %310 {offsets = [0, 32], sizes = [16, 32], strides = [1, 1]} : vector<16x128xf32> to vector<16x32xf32>
    %313 = vector.extract_strided_slice %310 {offsets = [0, 96], sizes = [16, 32], strides = [1, 1]} : vector<16x128xf32> to vector<16x32xf32>
    %314 = vector.extract_strided_slice %305 {offsets = [0, 64], sizes = [16, 32], strides = [1, 1]} : vector<16x128xf32> to vector<16x32xf32>
    %315 = math.tanh %314 : vector<16x32xf32>
    %316 = arith.mulf %312, %294 : vector<16x32xf32>
    %317 = arith.mulf %311, %315 : vector<16x32xf32>
    %318 = arith.addf %316, %317 : vector<16x32xf32>
    %319 = math.tanh %318 : vector<16x32xf32>
    %320 = arith.mulf %313, %319 : vector<16x32xf32>
    %321 = arith.truncf %320 : vector<16x32xf32> to vector<16x32xbf16>
    %cst_118 = arith.constant dense<0.000000e+00> : vector<16x256xf32>
    %322 = tpu.matmul %321, %257, %cst_118 {dimension_numbers = #tpu.dot_dimension_numbers<[1], [0], [0], [1], [0, 0, 1, 1], [], []>} : vector<16x32xbf16>, vector<32x256xbf16>, vector<16x256xf32> -> vector<16x256xf32>
    %323 = vector.extract_strided_slice %322 {offsets = [0, 0], sizes = [16, 128], strides = [1, 1]} : vector<16x256xf32> to vector<16x128xf32>
    %324 = vector.extract_strided_slice %322 {offsets = [0, 128], sizes = [16, 128], strides = [1, 1]} : vector<16x256xf32> to vector<16x128xf32>
    %325 = arith.select %2, %323, %324 : vector<16x128xi1>, vector<16x128xf32>
    %c16_119 = arith.constant 16 : index
    %c0_120 = arith.constant 0 : index
    %326 = vector.load %arg12[%c16_119, %c0_120] : memref<64x256xf32, #tpu.memory_space<vmem>>, vector<8x128xf32>
    %c40_121 = arith.constant 40 : index
    %c128_122 = arith.constant 128 : index
    %327 = vector.load %arg12[%c40_121, %c128_122] : memref<64x256xf32, #tpu.memory_space<vmem>>, vector<8x128xf32>
    %328 = tpu.concatenate %326, %327 in 0 : vector<8x128xf32>, vector<8x128xf32> -> vector<16x128xf32>
    %329 = arith.addf %325, %328 : vector<16x128xf32>
    %330 = arith.negf %329 : vector<16x128xf32>
    %331 = math.exp %330 : vector<16x128xf32>
    %cst_123 = arith.constant 1.000000e+00 : f32
    %332 = vector.broadcast %cst_123 : f32 to vector<16x128xf32>
    %333 = arith.addf %332, %331 : vector<16x128xf32>
    %334 = arith.divf %332, %333 : vector<16x128xf32>
    %335 = vector.extract_strided_slice %334 {offsets = [0, 0], sizes = [16, 32], strides = [1, 1]} : vector<16x128xf32> to vector<16x32xf32>
    %336 = vector.extract_strided_slice %334 {offsets = [0, 32], sizes = [16, 32], strides = [1, 1]} : vector<16x128xf32> to vector<16x32xf32>
    %337 = vector.extract_strided_slice %334 {offsets = [0, 96], sizes = [16, 32], strides = [1, 1]} : vector<16x128xf32> to vector<16x32xf32>
    %338 = vector.extract_strided_slice %329 {offsets = [0, 64], sizes = [16, 32], strides = [1, 1]} : vector<16x128xf32> to vector<16x32xf32>
    %339 = math.tanh %338 : vector<16x32xf32>
    %340 = arith.mulf %336, %318 : vector<16x32xf32>
    %341 = arith.mulf %335, %339 : vector<16x32xf32>
    %342 = arith.addf %340, %341 : vector<16x32xf32>
    %343 = math.tanh %342 : vector<16x32xf32>
    %344 = arith.mulf %337, %343 : vector<16x32xf32>
    %345 = arith.truncf %344 : vector<16x32xf32> to vector<16x32xbf16>
    %cst_124 = arith.constant dense<0.000000e+00> : vector<16x256xf32>
    %346 = tpu.matmul %345, %257, %cst_124 {dimension_numbers = #tpu.dot_dimension_numbers<[1], [0], [0], [1], [0, 0, 1, 1], [], []>} : vector<16x32xbf16>, vector<32x256xbf16>, vector<16x256xf32> -> vector<16x256xf32>
    %347 = vector.extract_strided_slice %346 {offsets = [0, 0], sizes = [16, 128], strides = [1, 1]} : vector<16x256xf32> to vector<16x128xf32>
    %348 = vector.extract_strided_slice %346 {offsets = [0, 128], sizes = [16, 128], strides = [1, 1]} : vector<16x256xf32> to vector<16x128xf32>
    %349 = arith.select %2, %347, %348 : vector<16x128xi1>, vector<16x128xf32>
    %c24_125 = arith.constant 24 : index
    %c0_126 = arith.constant 0 : index
    %350 = vector.load %arg12[%c24_125, %c0_126] : memref<64x256xf32, #tpu.memory_space<vmem>>, vector<8x128xf32>
    %c32_127 = arith.constant 32 : index
    %c128_128 = arith.constant 128 : index
    %351 = vector.load %arg12[%c32_127, %c128_128] : memref<64x256xf32, #tpu.memory_space<vmem>>, vector<8x128xf32>
    %352 = tpu.concatenate %350, %351 in 0 : vector<8x128xf32>, vector<8x128xf32> -> vector<16x128xf32>
    %353 = arith.addf %349, %352 : vector<16x128xf32>
    %354 = arith.negf %353 : vector<16x128xf32>
    %355 = math.exp %354 : vector<16x128xf32>
    %cst_129 = arith.constant 1.000000e+00 : f32
    %356 = vector.broadcast %cst_129 : f32 to vector<16x128xf32>
    %357 = arith.addf %356, %355 : vector<16x128xf32>
    %358 = arith.divf %356, %357 : vector<16x128xf32>
    %359 = vector.extract_strided_slice %358 {offsets = [0, 0], sizes = [16, 32], strides = [1, 1]} : vector<16x128xf32> to vector<16x32xf32>
    %360 = vector.extract_strided_slice %358 {offsets = [0, 32], sizes = [16, 32], strides = [1, 1]} : vector<16x128xf32> to vector<16x32xf32>
    %361 = vector.extract_strided_slice %358 {offsets = [0, 96], sizes = [16, 32], strides = [1, 1]} : vector<16x128xf32> to vector<16x32xf32>
    %362 = vector.extract_strided_slice %353 {offsets = [0, 64], sizes = [16, 32], strides = [1, 1]} : vector<16x128xf32> to vector<16x32xf32>
    %363 = math.tanh %362 : vector<16x32xf32>
    %364 = arith.mulf %360, %342 : vector<16x32xf32>
    %365 = arith.mulf %359, %363 : vector<16x32xf32>
    %366 = arith.addf %364, %365 : vector<16x32xf32>
    %367 = math.tanh %366 : vector<16x32xf32>
    %368 = arith.mulf %361, %367 : vector<16x32xf32>
    %369 = vector.extract_strided_slice %368 {offsets = [0, 0], sizes = [8, 32], strides = [1, 1]} : vector<16x32xf32> to vector<8x32xf32>
    %370 = arith.truncf %368 : vector<16x32xf32> to vector<16x32xbf16>
    %cst_130 = arith.constant dense<0.000000e+00> : vector<16x256xf32>
    %371 = tpu.matmul %370, %257, %cst_130 {dimension_numbers = #tpu.dot_dimension_numbers<[1], [0], [0], [1], [0, 0, 1, 1], [], []>} : vector<16x32xbf16>, vector<32x256xbf16>, vector<16x256xf32> -> vector<16x256xf32>
    %372 = vector.extract_strided_slice %371 {offsets = [0, 0], sizes = [16, 128], strides = [1, 1]} : vector<16x256xf32> to vector<16x128xf32>
    %373 = vector.extract_strided_slice %371 {offsets = [0, 128], sizes = [16, 128], strides = [1, 1]} : vector<16x256xf32> to vector<16x128xf32>
    %374 = arith.select %2, %372, %373 : vector<16x128xi1>, vector<16x128xf32>
    %c32_131 = arith.constant 32 : index
    %c0_132 = arith.constant 0 : index
    %375 = vector.load %arg12[%c32_131, %c0_132] : memref<64x256xf32, #tpu.memory_space<vmem>>, vector<8x128xf32>
    %c24_133 = arith.constant 24 : index
    %c128_134 = arith.constant 128 : index
    %376 = vector.load %arg12[%c24_133, %c128_134] : memref<64x256xf32, #tpu.memory_space<vmem>>, vector<8x128xf32>
    %377 = tpu.concatenate %375, %376 in 0 : vector<8x128xf32>, vector<8x128xf32> -> vector<16x128xf32>
    %378 = arith.addf %374, %377 : vector<16x128xf32>
    %379 = arith.negf %378 : vector<16x128xf32>
    %380 = math.exp %379 : vector<16x128xf32>
    %cst_135 = arith.constant 1.000000e+00 : f32
    %381 = vector.broadcast %cst_135 : f32 to vector<16x128xf32>
    %382 = arith.addf %381, %380 : vector<16x128xf32>
    %383 = arith.divf %381, %382 : vector<16x128xf32>
    %384 = vector.extract_strided_slice %383 {offsets = [0, 0], sizes = [16, 32], strides = [1, 1]} : vector<16x128xf32> to vector<16x32xf32>
    %385 = vector.extract_strided_slice %383 {offsets = [0, 32], sizes = [16, 32], strides = [1, 1]} : vector<16x128xf32> to vector<16x32xf32>
    %386 = vector.extract_strided_slice %383 {offsets = [0, 96], sizes = [16, 32], strides = [1, 1]} : vector<16x128xf32> to vector<16x32xf32>
    %387 = vector.extract_strided_slice %378 {offsets = [0, 64], sizes = [16, 32], strides = [1, 1]} : vector<16x128xf32> to vector<16x32xf32>
    %388 = math.tanh %387 : vector<16x32xf32>
    %389 = arith.mulf %385, %366 : vector<16x32xf32>
    %390 = arith.mulf %384, %388 : vector<16x32xf32>
    %391 = arith.addf %389, %390 : vector<16x32xf32>
    %392 = math.tanh %391 : vector<16x32xf32>
    %393 = arith.mulf %386, %392 : vector<16x32xf32>
    %394 = vector.extract_strided_slice %393 {offsets = [8, 0], sizes = [8, 32], strides = [1, 1]} : vector<16x32xf32> to vector<8x32xf32>
    %c0_136 = arith.constant 0 : index
    %c0_137 = arith.constant 0 : index
    %395 = vector.load %arg9[%c0_136, %c0_137] : memref<1x64xf32, #tpu.memory_space<vmem>>, vector<1x64xf32>
    %396 = vector.extract_strided_slice %395 {offsets = [0, 0], sizes = [1, 32], strides = [1, 1]} : vector<1x64xf32> to vector<1x32xf32>
    %397 = vector.broadcast %396 : vector<1x32xf32> to vector<8x32xf32>
    %398 = arith.mulf %369, %397 : vector<8x32xf32>
    %cst_138 = arith.constant dense<0.000000e+00> : vector<8xf32>
    %399 = vector.multi_reduction <add>, %398, %cst_138 [1] : vector<8x32xf32> to vector<8xf32>
    %400 = vector.shape_cast %399 : vector<8xf32> to vector<8x1xf32>
    %401 = vector.extract_strided_slice %395 {offsets = [0, 32], sizes = [1, 32], strides = [1, 1]} : vector<1x64xf32> to vector<1x32xf32>
    %402 = vector.broadcast %401 : vector<1x32xf32> to vector<8x32xf32>
    %403 = arith.mulf %394, %402 : vector<8x32xf32>
    %cst_139 = arith.constant dense<0.000000e+00> : vector<8xf32>
    %404 = vector.multi_reduction <add>, %403, %cst_139 [1] : vector<8x32xf32> to vector<8xf32>
    %405 = vector.shape_cast %404 : vector<8xf32> to vector<8x1xf32>
    %406 = arith.addf %400, %405 : vector<8x1xf32>
    %c0_140 = arith.constant 0 : index
    %c0_141 = arith.constant 0 : index
    %407 = vector.load %arg10[%c0_140, %c0_141] : memref<1x1xf32, #tpu.memory_space<vmem>>, vector<1x1xf32>
    %408 = vector.broadcast %407 : vector<1x1xf32> to vector<8x1xf32>
    %409 = arith.addf %406, %408 : vector<8x1xf32>
    %c0_142 = arith.constant 0 : index
    %c0_143 = arith.constant 0 : index
    %410 = vector.load %arg11[%c0_142, %c0_143] : memref<8x1xf32, #tpu.memory_space<vmem>>, vector<8x1xf32>
    tpu.vector_store %arg11[%c0_142, %c0_143], %409 {strides = array<i32>} : memref<8x1xf32, #tpu.memory_space<vmem>>, vector<8x1xf32>,
    return
  }
}

</mosaic_0001>

<llo_original>
// kernel: _lambda_.1
$region0: #{_lambda_.1}
  #allocation0 [shape = 'u32[]', space=smem, size = 0x4, offset = 0x4, fixed_abs, tag = 'smem constant byte address 0x4 - core index']
  #allocation1 [shape = 'u32[144,128]{1,0:T(1,128)}', space=vmem, size = 0x12000, scoped, tag = 'internal scratch']
  #allocation2 [shape = 'f32[64,256]{1,0:T(8,128)}', space=vmem, size = 0x10000, scoped, tag = 'scratch operand']
  #allocation3 [shape = 'bf16[64,32]{1,0:T(16,128)(2,1)}', space=vmem, size = 0x4000, scoped, tag = 'scratch operand']
  #allocation4 [shape = 'bf16[64,32]{1,0:T(16,128)(2,1)}', space=vmem, size = 0x4000, scoped, tag = 'scratch operand']
  #allocation5 [shape = 'bf16[64,32]{1,0:T(16,128)(2,1)}', space=vmem, size = 0x4000, scoped, tag = 'scratch operand']
  #allocation6 [shape = 'bf16[64,32]{1,0:T(16,128)(2,1)}', space=vmem, size = 0x4000, scoped, tag = 'scratch operand']
  #allocation7 [shape = 'f32[1,1]{1,0:T(1,128)S(1)}', space=vmem, size = 0x200, scoped, tag = 'scoped memory for _lambda_.1']
  %s0 = inlined_call_operand.vmem [shape: f32[64,8], index: 0, kind: input, shape index: {}]
  %s1 = inlined_call_operand.vmem [shape: f32[2,16,32], index: 1, kind: input, shape index: {}]
  %s2 = inlined_call_operand.vmem [shape: f32[2,16,32], index: 2, kind: input, shape index: {}]
  %s3 = inlined_call_operand.vmem [shape: bf16[8,256], index: 3, kind: input, shape index: {}]
  %s4 = inlined_call_operand.vmem [shape: bf16[32,256], index: 4, kind: input, shape index: {}]
  %s5 = inlined_call_operand.vmem [shape: f32[1,256], index: 5, kind: input, shape index: {}]
  %s6 = inlined_call_operand.vmem [shape: bf16[64,256], index: 6, kind: input, shape index: {}]
  %s7 = inlined_call_operand.vmem [shape: bf16[32,256], index: 7, kind: input, shape index: {}]
  %s8 = inlined_call_operand.vmem [shape: f32[1,256], index: 8, kind: input, shape index: {}]
  %s9 = inlined_call_operand.vmem [shape: f32[1,64], index: 9, kind: input, shape index: {}]
  %s10 = inlined_call_operand.<no memory space> [shape: f32[1,1], index: 10, kind: input, shape index: {}]
  %s11 = inlined_call_operand.vmem [shape: f32[8,1], index: 11, kind: output, shape index: {}]
  %s12 = sld [smem:[#allocation0]]
  $region54: #{_lambda_.1} parent=0
    _
  %s14 = ssub.s32 1, %s12
  %s15 = scalar_select 0, %s14, %s12
  %v16 = vstv %s10
  %17 = vst [vmem:[#allocation7] sm:$0x1] %v16
  // Predicated region
  $region2: #{_lambda_.1} parent=0 // pred_check
    _
  $region3: #{_lambda_.1} parent=0 // pred_check_branch
    %19 = sbr.rel (0) target = $region5
  $region4: #{_lambda_.1} parent=0 // pred_region
    _
  $region5: #{_lambda_.1} parent=0 // pred_fallthru
    _
  // Predicated region
  $region6: #{_lambda_.1} parent=0 // pred_check
    _
  $region7: #{_lambda_.1} parent=0 // pred_check_branch
    %21 = sbr.rel (0) target = $region9
  $region8: #{_lambda_.1} parent=0 // pred_region
    _
  $region9: #{_lambda_.1} parent=0 // pred_fallthru
    _
  // Predicated region
  $region10: #{_lambda_.1} parent=0 // pred_check
    _
  $region11: #{_lambda_.1} parent=0 // pred_check_branch
    %23 = sbr.rel (0) target = $region13
  $region12: #{_lambda_.1} parent=0 // pred_region
    _
  $region13: #{_lambda_.1} parent=0 // pred_fallthru
    _
  // Predicated region
  $region14: #{_lambda_.1} parent=0 // pred_check
    _
  $region15: #{_lambda_.1} parent=0 // pred_check_branch
    %25 = sbr.rel (0) target = $region17
  $region16: #{_lambda_.1} parent=0 // pred_region
    _
  $region17: #{_lambda_.1} parent=0 // pred_fallthru
    _
  // Predicated region
  $region18: #{_lambda_.1} parent=0 // pred_check
    _
  $region19: #{_lambda_.1} parent=0 // pred_check_branch
    %27 = sbr.rel (0) target = $region21
  $region20: #{_lambda_.1} parent=0 // pred_region
    _
  $region21: #{_lambda_.1} parent=0 // pred_fallthru
    _
  // Predicated region
  $region22: #{_lambda_.1} parent=0 // pred_check
    _
  $region23: #{_lambda_.1} parent=0 // pred_check_branch
    %29 = sbr.rel (0) target = $region25
  $region24: #{_lambda_.1} parent=0 // pred_region
    _
  $region25: #{_lambda_.1} parent=0 // pred_fallthru
    _
  // Predicated region
  $region26: #{_lambda_.1} parent=0 // pred_check
    _
  $region27: #{_lambda_.1} parent=0 // pred_check_branch
    %31 = sbr.rel (0) target = $region29
  $region28: #{_lambda_.1} parent=0 // pred_region
    _
  $region29: #{_lambda_.1} parent=0 // pred_fallthru
    _
  // Predicated region
  $region30: #{_lambda_.1} parent=0 // pred_check
    _
  $region31: #{_lambda_.1} parent=0 // pred_check_branch
    %33 = sbr.rel (0) target = $region33
  $region32: #{_lambda_.1} parent=0 // pred_region
    _
  $region33: #{_lambda_.1} parent=0 // pred_fallthru
    _
  // Predicated region
  $region34: #{_lambda_.1} parent=0 // pred_check
    _
  $region35: #{_lambda_.1} parent=0 // pred_check_branch
    %35 = sbr.rel (0) target = $region37
  $region36: #{_lambda_.1} parent=0 // pred_region
    _
  $region37: #{_lambda_.1} parent=0 // pred_fallthru
    _
  // Predicated region
  $region38: #{_lambda_.1} parent=0 // pred_check
    _
  $region39: #{_lambda_.1} parent=0 // pred_check_branch
    %37 = sbr.rel (0) target = $region41
  $region40: #{_lambda_.1} parent=0 // pred_region
    _
  $region41: #{_lambda_.1} parent=0 // pred_fallthru
    _
  // Predicated region
  $region42: #{_lambda_.1} parent=0 // pred_check
    _
  $region43: #{_lambda_.1} parent=0 // pred_check_branch
    %39 = sbr.rel (0) target = $region45
  $region44: #{_lambda_.1} parent=0 // pred_region
    _
  $region45: #{_lambda_.1} parent=0 // pred_fallthru
    _
  %v41 = vlaneseq
  %v42 = vshrl.u32 %v41, 7
  %v43 = vadd.s32 %v42, 8
  %vm44 = vcmp.lt.s32.totalorder %v42, 8
  %vm45 = vcmp.lt.s32.totalorder %v43, 8
  %v46 = vld [vmem:[%s3] sm:$0xff]
  %v47 = vld [vmem:[%s4] sm:$0xff]
  %v48 = vld [vmem:[%s4 + $0x8] sm:$0xff]
  %v49 = vld [vmem:[%s4 + $0x10] sm:$0xff]
  %v50 = vld [vmem:[%s4 + $0x18] sm:$0xff]
  %v51 = vld [vmem:[%s5] sm:$0x3]
  %v52 = vld [vmem:[%s0] sm:$0xff]
  %v53 = vld [vmem:[%s0 + $0x8] sm:$0xff]
  %v54 = vld [vmem:[%s0 + $0x10] sm:$0xff]
  %v55 = vld [vmem:[%s0 + $0x18] sm:$0xff]
  %v56 = vld [vmem:[%s0 + $0x20] sm:$0xff]
  %v57 = vld [vmem:[%s0 + $0x28] sm:$0xff]
  %v58 = vld [vmem:[%s0 + $0x30] sm:$0xff]
  %v59 = vld [vmem:[%s0 + $0x38] sm:$0xff]
  %v60 = vpack.c.bf16 %v53, %v52
  %v61 = vpack.c.bf16 %v55, %v54
  %v62 = vpack.c.bf16 %v57, %v56
  %v63 = vpack.c.bf16 %v59, %v58
  %v65 = vlaneseq
  %v66 = vshrl.u32 %v65, 7
  %v67 = vsub.s32 0, %v66
  %v68 = vrot.slane %v51, %v67
  %v69 = vlaneseq
  %v70 = vshrl.u32 %v69, 7
  %v71 = vsub.s32 1, %v70
  %v72 = vrot.slane %v51, %v71
  %v76 = vunpack.c.l.b16 %v46
  %v77 = vunpack.c.h.b16 %v46
  %v78 = vpack.c.b16 %v76, %v76
  %v79 = vpack.c.b16 %v77, %v77
  %vm80 = vcmask 64512
  %v82 = vsel %vm80, %v60, 0
  %v85 = vsel %vm80, %v61, 0
  %v88 = vsel %vm80, %v62, 0
  %v91 = vsel %vm80, %v63, 0
  %vm93 = vcmask 1043456
  %v95 = vsel %vm93, %v78, 0
  %v98 = vsel %vm93, %v79, 0
  %100 = vmatprep.subr.bf16.mxu0 %v98
  %101 = vmatpush1.bf16.msra.mxu0 %v95
  %102 = vmatprep.subr.bf16.mxu0 0
  %103 = vmatpush1.bf16.msra.mxu0 0
  %104 = vmatprep.subr.bf16.mxu0 0
  %105 = vmatpush1.bf16.msra.mxu0 0
  %106 = vmatprep.subr.bf16.mxu0 0
  %107 = vmatpush1.bf16.msra.mxu0 0
  %108 = vmatprep.subr.bf16.mxu0 0
  %109 = vmatpush1.bf16.msra.mxu0 0
  %110 = vmatprep.subr.bf16.mxu0 0
  %111 = vmatpush1.bf16.msra.mxu0 0
  %112 = vmatprep.subr.bf16.mxu0 0
  %113 = vmatpush1.bf16.msra.mxu0 0
  %114 = vmatprep.subr.bf16.mxu0 0
  %115 = vmatpush1.bf16.msra.mxu0 0
  %116 = vmatprep.subr.bf16.mxu0 0
  %117 = vmatpush1.bf16.msra.mxu0 0
  %118 = vmatprep.subr.bf16.mxu0 0
  %119 = vmatpush1.bf16.msra.mxu0 0
  %120 = vmatprep.subr.bf16.mxu0 0
  %121 = vmatpush1.bf16.msra.mxu0 0
  %122 = vmatprep.subr.bf16.mxu0 0
  %123 = vmatpush1.bf16.msra.mxu0 0
  %124 = vmatprep.subr.bf16.mxu0 0
  %125 = vmatpush1.bf16.msra.mxu0 0
  %126 = vmatprep.subr.bf16.mxu0 0
  %127 = vmatpush1.bf16.msra.mxu0 0
  %128 = vmatprep.subr.bf16.mxu0 0
  %129 = vmatpush1.bf16.msra.mxu0 0
  %130 = vmatprep.subr.bf16.mxu0 0
  %131 = vmatpush1.bf16.msra.mxu0 0
  %132 = vmatprep.mubr.bf16.mxu0 0
  %133 = vmatmul.mubr.bf16.gmra.mrb[0].mxu0 %v82
  %v134 = vpop.f32.mrb[0].mxu0
  %v135 = vadd.f32 %v68, %v134
  %v136 = vpop.f32.mrb[0].mxu0
  %v137 = vadd.f32 %v72, %v136
  %v138 = vpop.f32.mrb[0].mxu0
  %v139 = vadd.f32 %v68, %v138
  %v140 = vpop.f32.mrb[0].mxu0
  %v141 = vadd.f32 %v72, %v140
  %142 = vmatprep.mubr.bf16.mxu0 0
  %143 = vmatmul.mubr.bf16.gmra.mrb[0].mxu0 %v85
  %v144 = vpop.f32.mrb[0].mxu0
  %v145 = vadd.f32 %v68, %v144
  %v146 = vpop.f32.mrb[0].mxu0
  %v147 = vadd.f32 %v72, %v146
  %v148 = vpop.f32.mrb[0].mxu0
  %v149 = vadd.f32 %v68, %v148
  %v150 = vpop.f32.mrb[0].mxu0
  %v151 = vadd.f32 %v72, %v150
  %152 = vmatprep.mubr.bf16.mxu0 0
  %153 = vmatmul.mubr.bf16.gmra.mrb[0].mxu0 %v88
  %v154 = vpop.f32.mrb[0].mxu0
  %v155 = vadd.f32 %v68, %v154
  %v156 = vpop.f32.mrb[0].mxu0
  %v157 = vadd.f32 %v72, %v156
  %v158 = vpop.f32.mrb[0].mxu0
  %v159 = vadd.f32 %v68, %v158
  %v160 = vpop.f32.mrb[0].mxu0
  %v161 = vadd.f32 %v72, %v160
  %162 = vmatprep.mubr.bf16.mxu0 0
  %163 = vmatmul.mubr.bf16.gmra.mrb[0].mxu0 %v91
  %v164 = vpop.f32.mrb[0].mxu0
  %v165 = vadd.f32 %v68, %v164
  %v166 = vpop.f32.mrb[0].mxu0
  %v167 = vadd.f32 %v72, %v166
  %v168 = vpop.f32.mrb[0].mxu0
  %v169 = vadd.f32 %v68, %v168
  %v170 = vpop.f32.mrb[0].mxu0
  %v171 = vadd.f32 %v72, %v170
  %172 = vdwg.mxu0
  %173 = vst [vmem:[#allocation2] sm:$0xff] %v135
  %174 = vst [vmem:[#allocation2 + $0x8] sm:$0xff] %v137
  %175 = vst [vmem:[#allocation2 + $0x10] sm:$0xff] %v139
  %176 = vst [vmem:[#allocation2 + $0x18] sm:$0xff] %v141
  %177 = vst [vmem:[#allocation2 + $0x20] sm:$0xff] %v145
  %178 = vst [vmem:[#allocation2 + $0x28] sm:$0xff] %v147
  %179 = vst [vmem:[#allocation2 + $0x30] sm:$0xff] %v149
  %180 = vst [vmem:[#allocation2 + $0x38] sm:$0xff] %v151
  %181 = vst [vmem:[#allocation2 + $0x40] sm:$0xff] %v155
  %182 = vst [vmem:[#allocation2 + $0x48] sm:$0xff] %v157
  %183 = vst [vmem:[#allocation2 + $0x50] sm:$0xff] %v159
  %184 = vst [vmem:[#allocation2 + $0x58] sm:$0xff] %v161
  %185 = vst [vmem:[#allocation2 + $0x60] sm:$0xff] %v165
  %186 = vst [vmem:[#allocation2 + $0x68] sm:$0xff] %v167
  %187 = vst [vmem:[#allocation2 + $0x70] sm:$0xff] %v169
  %188 = vst [vmem:[#allocation2 + $0x78] sm:$0xff] %v171
  %v189 = vld [vmem:[%s1] sm:$0xff]
  %v190 = vld [vmem:[%s1 + $0x8] sm:$0xff]
  %v191 = vld [vmem:[%s2] sm:$0xff]
  %v192 = vld [vmem:[%s2 + $0x8] sm:$0xff]
  %v193 = vpack.c.bf16 %v190, %v189
  %v198 = vunpack.c.l.b16 %v47
  %v199 = vunpack.c.h.b16 %v47
  %v200 = vunpack.c.l.b16 %v48
  %v201 = vunpack.c.h.b16 %v48
  %v202 = vunpack.c.l.b16 %v49
  %v203 = vunpack.c.h.b16 %v49
  %v204 = vunpack.c.l.b16 %v50
  %v205 = vunpack.c.h.b16 %v50
  %v206 = vpack.c.b16 %v200, %v198
  %v207 = vpack.c.b16 %v201, %v199
  %v208 = vpack.c.b16 %v204, %v202
  %v209 = vpack.c.b16 %v205, %v203
  %vm214 = vcmask 261120
  %v216 = vsel %vm214, %v193, 0
  %218 = vmatprep.subr.bf16.mxu0 %v207
  %219 = vmatpush1.bf16.msra.mxu0 %v206
  %220 = vmatprep.subr.bf16.mxu0 %v209
  %221 = vmatpush1.bf16.msra.mxu0 %v208
  %222 = vmatprep.subr.bf16.mxu0 0
  %223 = vmatpush1.bf16.msra.mxu0 0
  %224 = vmatprep.subr.bf16.mxu0 0
  %225 = vmatpush1.bf16.msra.mxu0 0
  %226 = vmatprep.subr.bf16.mxu0 0
  %227 = vmatpush1.bf16.msra.mxu0 0
  %228 = vmatprep.subr.bf16.mxu0 0
  %229 = vmatpush1.bf16.msra.mxu0 0
  %230 = vmatprep.subr.bf16.mxu0 0
  %231 = vmatpush1.bf16.msra.mxu0 0
  %232 = vmatprep.subr.bf16.mxu0 0
  %233 = vmatpush1.bf16.msra.mxu0 0
  %234 = vmatprep.subr.bf16.mxu0 0
  %235 = vmatpush1.bf16.msra.mxu0 0
  %236 = vmatprep.subr.bf16.mxu0 0
  %237 = vmatpush1.bf16.msra.mxu0 0
  %238 = vmatprep.subr.bf16.mxu0 0
  %239 = vmatpush1.bf16.msra.mxu0 0
  %240 = vmatprep.subr.bf16.mxu0 0
  %241 = vmatpush1.bf16.msra.mxu0 0
  %242 = vmatprep.subr.bf16.mxu0 0
  %243 = vmatpush1.bf16.msra.mxu0 0
  %244 = vmatprep.subr.bf16.mxu0 0
  %245 = vmatpush1.bf16.msra.mxu0 0
  %246 = vmatprep.subr.bf16.mxu0 0
  %247 = vmatpush1.bf16.msra.mxu0 0
  %248 = vmatprep.subr.bf16.mxu0 0
  %249 = vmatpush1.bf16.msra.mxu0 0
  %250 = vmatprep.mubr.bf16.mxu0 0
  %251 = vmatmul.mubr.bf16.gmra.mrb[0].mxu0 %v216
  %v252 = vpop.f32.mrb[0].mxu0
  %v253 = vadd.f32 0.0, %v252
  %v254 = vpop.f32.mrb[0].mxu0
  %v255 = vadd.f32 0.0, %v254
  %v256 = vpop.f32.mrb[0].mxu0
  %v257 = vadd.f32 0.0, %v256
  %v258 = vpop.f32.mrb[0].mxu0
  %v259 = vadd.f32 0.0, %v258
  %260 = vdwg.mxu0
  %v261 = vsel %vm44, %v253, %v255
  %v262 = vsel %vm45, %v257, %v259
  %v263 = vld [vmem:[#allocation2] sm:$0xff]
  %v264 = vld [vmem:[#allocation2 + $0x78] sm:$0xff]
  %v265 = vadd.f32 %v261, %v263
  %v266 = vadd.f32 %v262, %v264
  %v267 = vxor.u32 %v265, 2147483648
  %v268 = vxor.u32 %v266, 2147483648
  %v269 = vmul.f32 %v267, 1.442695
  %v270 = vpow.pop %v269
  %v271 = vmul.f32 %v268, 1.442695
  %v272 = vpow.pop %v271
  %v273 = vadd.f32 %v270, 1.0
  %v274 = vadd.f32 %v272, 1.0
  %v275 = vrcp.pop %v273
  %v276 = vmul.f32 1.0, %v275
  %v277 = vrcp.pop %v274
  %v278 = vmul.f32 1.0, %v277
  %v279 = vtanh.pop %v265
  %v280 = vtanh.pop %v266
  %283 = vrot.lane.b32.xlu0 %v191, 32
  %v284 = vpop.permute.xlu0 %283
  %285 = vrot.lane.b32.xlu0 %v192, 32
  %v286 = vpop.permute.xlu0 %285
  %v289 = vmul.f32 %v276, %v284
  %v290 = vmul.f32 %v278, %v286
  %293 = vrot.lane.b32.xlu0 %v279, 64
  %v294 = vpop.permute.xlu0 %293
  %295 = vrot.lane.b32.xlu0 %v280, 64
  %v296 = vpop.permute.xlu0 %295
  %v299 = vmul.f32 %v276, %v294
  %v300 = vmul.f32 %v278, %v296
  %303 = vrot.lane.b32.xlu0 %v299, 32
  %v304 = vpop.permute.xlu0 %303
  %305 = vrot.lane.b32.xlu0 %v300, 32
  %v306 = vpop.permute.xlu0 %305
  %v309 = vadd.f32 %v289, %v304
  %v310 = vadd.f32 %v290, %v306
  %v311 = vtanh.pop %v309
  %v312 = vtanh.pop %v310
  %315 = vrot.lane.b32.xlu0 %v311, 64
  %v316 = vpop.permute.xlu0 %315
  %317 = vrot.lane.b32.xlu0 %v312, 64
  %v318 = vpop.permute.xlu0 %317
  %v321 = vmul.f32 %v276, %v316
  %v322 = vmul.f32 %v278, %v318
  %v323 = vpack.c.bf16 %v321, %v321
  %325 = vrot.lane.b32.xlu0 %v323, 32
  %v326 = vpop.permute.xlu0 %325
  %vm328 = vcmask 257024
  %329 = vst.msk [vmem:[#allocation3] sm:$0xf] %vm328, %v326
  %v330 = vpack.c.bf16 %v322, %v322
  %v332 = vrot.slane %v330, 4
  %333 = vrot.lane.b32.xlu0 %v332, 32
  %v334 = vpop.permute.xlu0 %333
  %vm336 = vcmask 261124
  %337 = vst.msk [vmem:[#allocation4 + $0x18] sm:$0xf0] %vm336, %v334
  %v338 = vpack.c.bf16 %v322, %v321
  %340 = vrot.lane.b32.xlu0 %v338, 32
  %v341 = vpop.permute.xlu0 %340
  %v343 = vsel %vm214, %v341, 0
  %345 = vmatprep.subr.bf16.mxu0 %v207
  %346 = vmatpush1.bf16.msra.mxu0 %v206
  %347 = vmatprep.subr.bf16.mxu0 %v209
  %348 = vmatpush1.bf16.msra.mxu0 %v208
  %349 = vmatprep.subr.bf16.mxu0 0
  %350 = vmatpush1.bf16.msra.mxu0 0
  %351 = vmatprep.subr.bf16.mxu0 0
  %352 = vmatpush1.bf16.msra.mxu0 0
  %353 = vmatprep.subr.bf16.mxu0 0
  %354 = vmatpush1.bf16.msra.mxu0 0
  %355 = vmatprep.subr.bf16.mxu0 0
  %356 = vmatpush1.bf16.msra.mxu0 0
  %357 = vmatprep.subr.bf16.mxu0 0
  %358 = vmatpush1.bf16.msra.mxu0 0
  %359 = vmatprep.subr.bf16.mxu0 0
  %360 = vmatpush1.bf16.msra.mxu0 0
  %361 = vmatprep.subr.bf16.mxu0 0
  %362 = vmatpush1.bf16.msra.mxu0 0
  %363 = vmatprep.subr.bf16.mxu0 0
  %364 = vmatpush1.bf16.msra.mxu0 0
  %365 = vmatprep.subr.bf16.mxu0 0
  %366 = vmatpush1.bf16.msra.mxu0 0
  %367 = vmatprep.subr.bf16.mxu0 0
  %368 = vmatpush1.bf16.msra.mxu0 0
  %369 = vmatprep.subr.bf16.mxu0 0
  %370 = vmatpush1.bf16.msra.mxu0 0
  %371 = vmatprep.subr.bf16.mxu0 0
  %372 = vmatpush1.bf16.msra.mxu0 0
  %373 = vmatprep.subr.bf16.mxu0 0
  %374 = vmatpush1.bf16.msra.mxu0 0
  %375 = vmatprep.subr.bf16.mxu0 0
  %376 = vmatpush1.bf16.msra.mxu0 0
  %377 = vmatprep.mubr.bf16.mxu0 0
  %378 = vmatmul.mubr.bf16.gmra.mrb[0].mxu0 %v343
  %v379 = vpop.f32.mrb[0].mxu0
  %v380 = vadd.f32 0.0, %v379
  %v381 = vpop.f32.mrb[0].mxu0
  %v382 = vadd.f32 0.0, %v381
  %v383 = vpop.f32.mrb[0].mxu0
  %v384 = vadd.f32 0.0, %v383
  %v385 = vpop.f32.mrb[0].mxu0
  %v386 = vadd.f32 0.0, %v385
  %387 = vdwg.mxu0
  %v388 = vsel %vm44, %v380, %v382
  %v389 = vsel %vm45, %v384, %v386
  %v390 = vld [vmem:[#allocation2 + $0x10] sm:$0xff]
  %v391 = vld [vmem:[#allocation2 + $0x68] sm:$0xff]
  %v392 = vadd.f32 %v388, %v390
  %v393 = vadd.f32 %v389, %v391
  %v394 = vxor.u32 %v392, 2147483648
  %v395 = vxor.u32 %v393, 2147483648
  %v396 = vmul.f32 %v394, 1.442695
  %v397 = vpow.pop %v396
  %v398 = vmul.f32 %v395, 1.442695
  %v399 = vpow.pop %v398
  %v400 = vadd.f32 %v397, 1.0
  %v401 = vadd.f32 %v399, 1.0
  %v402 = vrcp.pop %v400
  %v403 = vmul.f32 1.0, %v402
  %v404 = vrcp.pop %v401
  %v405 = vmul.f32 1.0, %v404
  %v406 = vtanh.pop %v392
  %v407 = vtanh.pop %v393
  %v408 = vmul.f32 %v403, %v309
  %v409 = vmul.f32 %v405, %v310
  %412 = vrot.lane.b32.xlu0 %v406, 64
  %v413 = vpop.permute.xlu0 %412
  %414 = vrot.lane.b32.xlu0 %v407, 64
  %v415 = vpop.permute.xlu0 %414
  %v418 = vmul.f32 %v403, %v413
  %v419 = vmul.f32 %v405, %v415
  %422 = vrot.lane.b32.xlu0 %v418, 32
  %v423 = vpop.permute.xlu0 %422
  %424 = vrot.lane.b32.xlu0 %v419, 32
  %v425 = vpop.permute.xlu0 %424
  %v428 = vadd.f32 %v408, %v423
  %v429 = vadd.f32 %v409, %v425
  %v430 = vtanh.pop %v428
  %v431 = vtanh.pop %v429
  %434 = vrot.lane.b32.xlu0 %v430, 64
  %v435 = vpop.permute.xlu0 %434
  %436 = vrot.lane.b32.xlu0 %v431, 64
  %v437 = vpop.permute.xlu0 %436
  %v440 = vmul.f32 %v403, %v435
  %v441 = vmul.f32 %v405, %v437
  %v442 = vpack.c.bf16 %v440, %v440
  %v444 = vrot.slane %v442, 4
  %445 = vrot.lane.b32.xlu0 %v444, 32
  %v446 = vpop.permute.xlu0 %445
  %448 = vst.msk [vmem:[#allocation3] sm:$0xf0] %vm336, %v446
  %v449 = vpack.c.bf16 %v441, %v441
  %451 = vrot.lane.b32.xlu0 %v449, 32
  %v452 = vpop.permute.xlu0 %451
  %454 = vst.msk [vmem:[#allocation4 + $0x18] sm:$0xf] %vm328, %v452
  %v455 = vpack.c.bf16 %v441, %v440
  %457 = vrot.lane.b32.xlu0 %v455, 32
  %v458 = vpop.permute.xlu0 %457
  %v460 = vsel %vm214, %v458, 0
  %462 = vmatprep.subr.bf16.mxu0 %v207
  %463 = vmatpush1.bf16.msra.mxu0 %v206
  %464 = vmatprep.subr.bf16.mxu0 %v209
  %465 = vmatpush1.bf16.msra.mxu0 %v208
  %466 = vmatprep.subr.bf16.mxu0 0
  %467 = vmatpush1.bf16.msra.mxu0 0
  %468 = vmatprep.subr.bf16.mxu0 0
  %469 = vmatpush1.bf16.msra.mxu0 0
  %470 = vmatprep.subr.bf16.mxu0 0
  %471 = vmatpush1.bf16.msra.mxu0 0
  %472 = vmatprep.subr.bf16.mxu0 0
  %473 = vmatpush1.bf16.msra.mxu0 0
  %474 = vmatprep.subr.bf16.mxu0 0
  %475 = vmatpush1.bf16.msra.mxu0 0
  %476 = vmatprep.subr.bf16.mxu0 0
  %477 = vmatpush1.bf16.msra.mxu0 0
  %478 = vmatprep.subr.bf16.mxu0 0
  %479 = vmatpush1.bf16.msra.mxu0 0
  %480 = vmatprep.subr.bf16.mxu0 0
  %481 = vmatpush1.bf16.msra.mxu0 0
  %482 = vmatprep.subr.bf16.mxu0 0
  %483 = vmatpush1.bf16.msra.mxu0 0
  %484 = vmatprep.subr.bf16.mxu0 0
  %485 = vmatpush1.bf16.msra.mxu0 0
  %486 = vmatprep.subr.bf16.mxu0 0
  %487 = vmatpush1.bf16.msra.mxu0 0
  %488 = vmatprep.subr.bf16.mxu0 0
  %489 = vmatpush1.bf16.msra.mxu0 0
  %490 = vmatprep.subr.bf16.mxu0 0
  %491 = vmatpush1.bf16.msra.mxu0 0
  %492 = vmatprep.subr.bf16.mxu0 0
  %493 = vmatpush1.bf16.msra.mxu0 0
  %494 = vmatprep.mubr.bf16.mxu0 0
  %495 = vmatmul.mubr.bf16.gmra.mrb[0].mxu0 %v460
  %v496 = vpop.f32.mrb[0].mxu0
  %v497 = vadd.f32 0.0, %v496
  %v498 = vpop.f32.mrb[0].mxu0
  %v499 = vadd.f32 0.0, %v498
  %v500 = vpop.f32.mrb[0].mxu0
  %v501 = vadd.f32 0.0, %v500
  %v502 = vpop.f32.mrb[0].mxu0
  %v503 = vadd.f32 0.0, %v502
  %504 = vdwg.mxu0
  %v505 = vsel %vm44, %v497, %v499
  %v506 = vsel %vm45, %v501, %v503
  %v507 = vld [vmem:[#allocation2 + $0x20] sm:$0xff]
  %v508 = vld [vmem:[#allocation2 + $0x58] sm:$0xff]
  %v509 = vadd.f32 %v505, %v507
  %v510 = vadd.f32 %v506, %v508
  %v511 = vxor.u32 %v509, 2147483648
  %v512 = vxor.u32 %v510, 2147483648
  %v513 = vmul.f32 %v511, 1.442695
  %v514 = vpow.pop %v513
  %v515 = vmul.f32 %v512, 1.442695
  %v516 = vpow.pop %v515
  %v517 = vadd.f32 %v514, 1.0
  %v518 = vadd.f32 %v516, 1.0
  %v519 = vrcp.pop %v517
  %v520 = vmul.f32 1.0, %v519
  %v521 = vrcp.pop %v518
  %v522 = vmul.f32 1.0, %v521
  %v523 = vtanh.pop %v509
  %v524 = vtanh.pop %v510
  %v525 = vmul.f32 %v520, %v428
  %v526 = vmul.f32 %v522, %v429
  %529 = vrot.lane.b32.xlu0 %v523, 64
  %v530 = vpop.permute.xlu0 %529
  %531 = vrot.lane.b32.xlu0 %v524, 64
  %v532 = vpop.permute.xlu0 %531
  %v535 = vmul.f32 %v520, %v530
  %v536 = vmul.f32 %v522, %v532
  %539 = vrot.lane.b32.xlu0 %v535, 32
  %v540 = vpop.permute.xlu0 %539
  %541 = vrot.lane.b32.xlu0 %v536, 32
  %v542 = vpop.permute.xlu0 %541
  %v545 = vadd.f32 %v525, %v540
  %v546 = vadd.f32 %v526, %v542
  %v547 = vtanh.pop %v545
  %v548 = vtanh.pop %v546
  %551 = vrot.lane.b32.xlu0 %v547, 64
  %v552 = vpop.permute.xlu0 %551
  %553 = vrot.lane.b32.xlu0 %v548, 64
  %v554 = vpop.permute.xlu0 %553
  %v557 = vmul.f32 %v520, %v552
  %v558 = vmul.f32 %v522, %v554
  %v559 = vpack.c.bf16 %v557, %v557
  %561 = vrot.lane.b32.xlu0 %v559, 32
  %v562 = vpop.permute.xlu0 %561
  %564 = vst.msk [vmem:[#allocation3 + $0x8] sm:$0xf] %vm328, %v562
  %v565 = vpack.c.bf16 %v558, %v558
  %v567 = vrot.slane %v565, 4
  %568 = vrot.lane.b32.xlu0 %v567, 32
  %v569 = vpop.permute.xlu0 %568
  %571 = vst.msk [vmem:[#allocation4 + $0x10] sm:$0xf0] %vm336, %v569
  %v572 = vpack.c.bf16 %v558, %v557
  %574 = vrot.lane.b32.xlu0 %v572, 32
  %v575 = vpop.permute.xlu0 %574
  %v577 = vsel %vm214, %v575, 0
  %579 = vmatprep.subr.bf16.mxu0 %v207
  %580 = vmatpush1.bf16.msra.mxu0 %v206
  %581 = vmatprep.subr.bf16.mxu0 %v209
  %582 = vmatpush1.bf16.msra.mxu0 %v208
  %583 = vmatprep.subr.bf16.mxu0 0
  %584 = vmatpush1.bf16.msra.mxu0 0
  %585 = vmatprep.subr.bf16.mxu0 0
  %586 = vmatpush1.bf16.msra.mxu0 0
  %587 = vmatprep.subr.bf16.mxu0 0
  %588 = vmatpush1.bf16.msra.mxu0 0
  %589 = vmatprep.subr.bf16.mxu0 0
  %590 = vmatpush1.bf16.msra.mxu0 0
  %591 = vmatprep.subr.bf16.mxu0 0
  %592 = vmatpush1.bf16.msra.mxu0 0
  %593 = vmatprep.subr.bf16.mxu0 0
  %594 = vmatpush1.bf16.msra.mxu0 0
  %595 = vmatprep.subr.bf16.mxu0 0
  %596 = vmatpush1.bf16.msra.mxu0 0
  %597 = vmatprep.subr.bf16.mxu0 0
  %598 = vmatpush1.bf16.msra.mxu0 0
  %599 = vmatprep.subr.bf16.mxu0 0
  %600 = vmatpush1.bf16.msra.mxu0 0
  %601 = vmatprep.subr.bf16.mxu0 0
  %602 = vmatpush1.bf16.msra.mxu0 0
  %603 = vmatprep.subr.bf16.mxu0 0
  %604 = vmatpush1.bf16.msra.mxu0 0
  %605 = vmatprep.subr.bf16.mxu0 0
  %606 = vmatpush1.bf16.msra.mxu0 0
  %607 = vmatprep.subr.bf16.mxu0 0
  %608 = vmatpush1.bf16.msra.mxu0 0
  %609 = vmatprep.subr.bf16.mxu0 0
  %610 = vmatpush1.bf16.msra.mxu0 0
  %611 = vmatprep.mubr.bf16.mxu0 0
  %612 = vmatmul.mubr.bf16.gmra.mrb[0].mxu0 %v577
  %v613 = vpop.f32.mrb[0].mxu0
  %v614 = vadd.f32 0.0, %v613
  %v615 = vpop.f32.mrb[0].mxu0
  %v616 = vadd.f32 0.0, %v615
  %v617 = vpop.f32.mrb[0].mxu0
  %v618 = vadd.f32 0.0, %v617
  %v619 = vpop.f32.mrb[0].mxu0
  %v620 = vadd.f32 0.0, %v619
  %621 = vdwg.mxu0
  %v622 = vsel %vm44, %v614, %v616
  %v623 = vsel %vm45, %v618, %v620
  %v624 = vld [vmem:[#allocation2 + $0x30] sm:$0xff]
  %v625 = vld [vmem:[#allocation2 + $0x48] sm:$0xff]
  %v626 = vadd.f32 %v622, %v624
  %v627 = vadd.f32 %v623, %v625
  %v628 = vxor.u32 %v626, 2147483648
  %v629 = vxor.u32 %v627, 2147483648
  %v630 = vmul.f32 %v628, 1.442695
  %v631 = vpow.pop %v630
  %v632 = vmul.f32 %v629, 1.442695
  %v633 = vpow.pop %v632
  %v634 = vadd.f32 %v631, 1.0
  %v635 = vadd.f32 %v633, 1.0
  %v636 = vrcp.pop %v634
  %v637 = vmul.f32 1.0, %v636
  %v638 = vrcp.pop %v635
  %v639 = vmul.f32 1.0, %v638
  %v640 = vtanh.pop %v626
  %v641 = vtanh.pop %v627
  %v642 = vmul.f32 %v637, %v545
  %v643 = vmul.f32 %v639, %v546
  %646 = vrot.lane.b32.xlu0 %v640, 64
  %v647 = vpop.permute.xlu0 %646
  %648 = vrot.lane.b32.xlu0 %v641, 64
  %v649 = vpop.permute.xlu0 %648
  %v652 = vmul.f32 %v637, %v647
  %v653 = vmul.f32 %v639, %v649
  %656 = vrot.lane.b32.xlu0 %v652, 32
  %v657 = vpop.permute.xlu0 %656
  %658 = vrot.lane.b32.xlu0 %v653, 32
  %v659 = vpop.permute.xlu0 %658
  %v662 = vadd.f32 %v642, %v657
  %v663 = vadd.f32 %v643, %v659
  %v664 = vtanh.pop %v662
  %v665 = vtanh.pop %v663
  %668 = vrot.lane.b32.xlu0 %v664, 64
  %v669 = vpop.permute.xlu0 %668
  %670 = vrot.lane.b32.xlu0 %v665, 64
  %v671 = vpop.permute.xlu0 %670
  %v674 = vmul.f32 %v637, %v669
  %v675 = vmul.f32 %v639, %v671
  %v676 = vpack.c.bf16 %v674, %v674
  %v678 = vrot.slane %v676, 4
  %679 = vrot.lane.b32.xlu0 %v678, 32
  %v680 = vpop.permute.xlu0 %679
  %682 = vst.msk [vmem:[#allocation3 + $0x8] sm:$0xf0] %vm336, %v680
  %v683 = vpack.c.bf16 %v675, %v675
  %685 = vrot.lane.b32.xlu0 %v683, 32
  %v686 = vpop.permute.xlu0 %685
  %688 = vst.msk [vmem:[#allocation4 + $0x10] sm:$0xf] %vm328, %v686
  %v689 = vpack.c.bf16 %v675, %v674
  %691 = vrot.lane.b32.xlu0 %v689, 32
  %v692 = vpop.permute.xlu0 %691
  %v694 = vsel %vm214, %v692, 0
  %696 = vmatprep.subr.bf16.mxu0 %v207
  %697 = vmatpush1.bf16.msra.mxu0 %v206
  %698 = vmatprep.subr.bf16.mxu0 %v209
  %699 = vmatpush1.bf16.msra.mxu0 %v208
  %700 = vmatprep.subr.bf16.mxu0 0
  %701 = vmatpush1.bf16.msra.mxu0 0
  %702 = vmatprep.subr.bf16.mxu0 0
  %703 = vmatpush1.bf16.msra.mxu0 0
  %704 = vmatprep.subr.bf16.mxu0 0
  %705 = vmatpush1.bf16.msra.mxu0 0
  %706 = vmatprep.subr.bf16.mxu0 0
  %707 = vmatpush1.bf16.msra.mxu0 0
  %708 = vmatprep.subr.bf16.mxu0 0
  %709 = vmatpush1.bf16.msra.mxu0 0
  %710 = vmatprep.subr.bf16.mxu0 0
  %711 = vmatpush1.bf16.msra.mxu0 0
  %712 = vmatprep.subr.bf16.mxu0 0
  %713 = vmatpush1.bf16.msra.mxu0 0
  %714 = vmatprep.subr.bf16.mxu0 0
  %715 = vmatpush1.bf16.msra.mxu0 0
  %716 = vmatprep.subr.bf16.mxu0 0
  %717 = vmatpush1.bf16.msra.mxu0 0
  %718 = vmatprep.subr.bf16.mxu0 0
  %719 = vmatpush1.bf16.msra.mxu0 0
  %720 = vmatprep.subr.bf16.mxu0 0
  %721 = vmatpush1.bf16.msra.mxu0 0
  %722 = vmatprep.subr.bf16.mxu0 0
  %723 = vmatpush1.bf16.msra.mxu0 0
  %724 = vmatprep.subr.bf16.mxu0 0
  %725 = vmatpush1.bf16.msra.mxu0 0
  %726 = vmatprep.subr.bf16.mxu0 0
  %727 = vmatpush1.bf16.msra.mxu0 0
  %728 = vmatprep.mubr.bf16.mxu0 0
  %729 = vmatmul.mubr.bf16.gmra.mrb[0].mxu0 %v694
  %v730 = vpop.f32.mrb[0].mxu0
  %v731 = vadd.f32 0.0, %v730
  %v732 = vpop.f32.mrb[0].mxu0
  %v733 = vadd.f32 0.0, %v732
  %v734 = vpop.f32.mrb[0].mxu0
  %v735 = vadd.f32 0.0, %v734
  %v736 = vpop.f32.mrb[0].mxu0
  %v737 = vadd.f32 0.0, %v736
  %738 = vdwg.mxu0
  %v739 = vsel %vm44, %v731, %v733
  %v740 = vsel %vm45, %v735, %v737
  %v741 = vld [vmem:[#allocation2 + $0x40] sm:$0xff]
  %v742 = vld [vmem:[#allocation2 + $0x38] sm:$0xff]
  %v743 = vadd.f32 %v739, %v741
  %v744 = vadd.f32 %v740, %v742
  %v745 = vxor.u32 %v743, 2147483648
  %v746 = vxor.u32 %v744, 2147483648
  %v747 = vmul.f32 %v745, 1.442695
  %v748 = vpow.pop %v747
  %v749 = vmul.f32 %v746, 1.442695
  %v750 = vpow.pop %v749
  %v751 = vadd.f32 %v748, 1.0
  %v752 = vadd.f32 %v750, 1.0
  %v753 = vrcp.pop %v751
  %v754 = vmul.f32 1.0, %v753
  %v755 = vrcp.pop %v752
  %v756 = vmul.f32 1.0, %v755
  %v757 = vtanh.pop %v743
  %v758 = vtanh.pop %v744
  %v759 = vmul.f32 %v754, %v662
  %v760 = vmul.f32 %v756, %v663
  %763 = vrot.lane.b32.xlu0 %v757, 64
  %v764 = vpop.permute.xlu0 %763
  %765 = vrot.lane.b32.xlu0 %v758, 64
  %v766 = vpop.permute.xlu0 %765
  %v769 = vmul.f32 %v754, %v764
  %v770 = vmul.f32 %v756, %v766
  %773 = vrot.lane.b32.xlu0 %v769, 32
  %v774 = vpop.permute.xlu0 %773
  %775 = vrot.lane.b32.xlu0 %v770, 32
  %v776 = vpop.permute.xlu0 %775
  %v779 = vadd.f32 %v759, %v774
  %v780 = vadd.f32 %v760, %v776
  %v781 = vtanh.pop %v779
  %v782 = vtanh.pop %v780
  %785 = vrot.lane.b32.xlu0 %v781, 64
  %v786 = vpop.permute.xlu0 %785
  %787 = vrot.lane.b32.xlu0 %v782, 64
  %v788 = vpop.permute.xlu0 %787
  %v791 = vmul.f32 %v754, %v786
  %v792 = vmul.f32 %v756, %v788
  %v793 = vpack.c.bf16 %v791, %v791
  %795 = vrot.lane.b32.xlu0 %v793, 32
  %v796 = vpop.permute.xlu0 %795
  %798 = vst.msk [vmem:[#allocation3 + $0x10] sm:$0xf] %vm328, %v796
  %v799 = vpack.c.bf16 %v792, %v792
  %v801 = vrot.slane %v799, 4
  %802 = vrot.lane.b32.xlu0 %v801, 32
  %v803 = vpop.permute.xlu0 %802
  %805 = vst.msk [vmem:[#allocation4 + $0x8] sm:$0xf0] %vm336, %v803
  %v806 = vpack.c.bf16 %v792, %v791
  %808 = vrot.lane.b32.xlu0 %v806, 32
  %v809 = vpop.permute.xlu0 %808
  %v811 = vsel %vm214, %v809, 0
  %813 = vmatprep.subr.bf16.mxu0 %v207
  %814 = vmatpush1.bf16.msra.mxu0 %v206
  %815 = vmatprep.subr.bf16.mxu0 %v209
  %816 = vmatpush1.bf16.msra.mxu0 %v208
  %817 = vmatprep.subr.bf16.mxu0 0
  %818 = vmatpush1.bf16.msra.mxu0 0
  %819 = vmatprep.subr.bf16.mxu0 0
  %820 = vmatpush1.bf16.msra.mxu0 0
  %821 = vmatprep.subr.bf16.mxu0 0
  %822 = vmatpush1.bf16.msra.mxu0 0
  %823 = vmatprep.subr.bf16.mxu0 0
  %824 = vmatpush1.bf16.msra.mxu0 0
  %825 = vmatprep.subr.bf16.mxu0 0
  %826 = vmatpush1.bf16.msra.mxu0 0
  %827 = vmatprep.subr.bf16.mxu0 0
  %828 = vmatpush1.bf16.msra.mxu0 0
  %829 = vmatprep.subr.bf16.mxu0 0
  %830 = vmatpush1.bf16.msra.mxu0 0
  %831 = vmatprep.subr.bf16.mxu0 0
  %832 = vmatpush1.bf16.msra.mxu0 0
  %833 = vmatprep.subr.bf16.mxu0 0
  %834 = vmatpush1.bf16.msra.mxu0 0
  %835 = vmatprep.subr.bf16.mxu0 0
  %836 = vmatpush1.bf16.msra.mxu0 0
  %837 = vmatprep.subr.bf16.mxu0 0
  %838 = vmatpush1.bf16.msra.mxu0 0
  %839 = vmatprep.subr.bf16.mxu0 0
  %840 = vmatpush1.bf16.msra.mxu0 0
  %841 = vmatprep.subr.bf16.mxu0 0
  %842 = vmatpush1.bf16.msra.mxu0 0
  %843 = vmatprep.subr.bf16.mxu0 0
  %844 = vmatpush1.bf16.msra.mxu0 0
  %845 = vmatprep.mubr.bf16.mxu0 0
  %846 = vmatmul.mubr.bf16.gmra.mrb[0].mxu0 %v811
  %v847 = vpop.f32.mrb[0].mxu0
  %v848 = vadd.f32 0.0, %v847
  %v849 = vpop.f32.mrb[0].mxu0
  %v850 = vadd.f32 0.0, %v849
  %v851 = vpop.f32.mrb[0].mxu0
  %v852 = vadd.f32 0.0, %v851
  %v853 = vpop.f32.mrb[0].mxu0
  %v854 = vadd.f32 0.0, %v853
  %855 = vdwg.mxu0
  %v856 = vsel %vm44, %v848, %v850
  %v857 = vsel %vm45, %v852, %v854
  %v858 = vld [vmem:[#allocation2 + $0x50] sm:$0xff]
  %v859 = vld [vmem:[#allocation2 + $0x28] sm:$0xff]
  %v860 = vadd.f32 %v856, %v858
  %v861 = vadd.f32 %v857, %v859
  %v862 = vxor.u32 %v860, 2147483648
  %v863 = vxor.u32 %v861, 2147483648
  %v864 = vmul.f32 %v862, 1.442695
  %v865 = vpow.pop %v864
  %v866 = vmul.f32 %v863, 1.442695
  %v867 = vpow.pop %v866
  %v868 = vadd.f32 %v865, 1.0
  %v869 = vadd.f32 %v867, 1.0
  %v870 = vrcp.pop %v868
  %v871 = vmul.f32 1.0, %v870
  %v872 = vrcp.pop %v869
  %v873 = vmul.f32 1.0, %v872
  %v874 = vtanh.pop %v860
  %v875 = vtanh.pop %v861
  %v876 = vmul.f32 %v871, %v779
  %v877 = vmul.f32 %v873, %v780
  %880 = vrot.lane.b32.xlu0 %v874, 64
  %v881 = vpop.permute.xlu0 %880
  %882 = vrot.lane.b32.xlu0 %v875, 64
  %v883 = vpop.permute.xlu0 %882
  %v886 = vmul.f32 %v871, %v881
  %v887 = vmul.f32 %v873, %v883
  %890 = vrot.lane.b32.xlu0 %v886, 32
  %v891 = vpop.permute.xlu0 %890
  %892 = vrot.lane.b32.xlu0 %v887, 32
  %v893 = vpop.permute.xlu0 %892
  %v896 = vadd.f32 %v876, %v891
  %v897 = vadd.f32 %v877, %v893
  %v898 = vtanh.pop %v896
  %v899 = vtanh.pop %v897
  %902 = vrot.lane.b32.xlu0 %v898, 64
  %v903 = vpop.permute.xlu0 %902
  %904 = vrot.lane.b32.xlu0 %v899, 64
  %v905 = vpop.permute.xlu0 %904
  %v908 = vmul.f32 %v871, %v903
  %v909 = vmul.f32 %v873, %v905
  %v910 = vpack.c.bf16 %v908, %v908
  %v912 = vrot.slane %v910, 4
  %913 = vrot.lane.b32.xlu0 %v912, 32
  %v914 = vpop.permute.xlu0 %913
  %916 = vst.msk [vmem:[#allocation3 + $0x10] sm:$0xf0] %vm336, %v914
  %v917 = vpack.c.bf16 %v909, %v909
  %919 = vrot.lane.b32.xlu0 %v917, 32
  %v920 = vpop.permute.xlu0 %919
  %922 = vst.msk [vmem:[#allocation4 + $0x8] sm:$0xf] %vm328, %v920
  %v923 = vpack.c.bf16 %v909, %v908
  %925 = vrot.lane.b32.xlu0 %v923, 32
  %v926 = vpop.permute.xlu0 %925
  %v928 = vsel %vm214, %v926, 0
  %930 = vmatprep.subr.bf16.mxu0 %v207
  %931 = vmatpush1.bf16.msra.mxu0 %v206
  %932 = vmatprep.subr.bf16.mxu0 %v209
  %933 = vmatpush1.bf16.msra.mxu0 %v208
  %934 = vmatprep.subr.bf16.mxu0 0
  %935 = vmatpush1.bf16.msra.mxu0 0
  %936 = vmatprep.subr.bf16.mxu0 0
  %937 = vmatpush1.bf16.msra.mxu0 0
  %938 = vmatprep.subr.bf16.mxu0 0
  %939 = vmatpush1.bf16.msra.mxu0 0
  %940 = vmatprep.subr.bf16.mxu0 0
  %941 = vmatpush1.bf16.msra.mxu0 0
  %942 = vmatprep.subr.bf16.mxu0 0
  %943 = vmatpush1.bf16.msra.mxu0 0
  %944 = vmatprep.subr.bf16.mxu0 0
  %945 = vmatpush1.bf16.msra.mxu0 0
  %946 = vmatprep.subr.bf16.mxu0 0
  %947 = vmatpush1.bf16.msra.mxu0 0
  %948 = vmatprep.subr.bf16.mxu0 0
  %949 = vmatpush1.bf16.msra.mxu0 0
  %950 = vmatprep.subr.bf16.mxu0 0
  %951 = vmatpush1.bf16.msra.mxu0 0
  %952 = vmatprep.subr.bf16.mxu0 0
  %953 = vmatpush1.bf16.msra.mxu0 0
  %954 = vmatprep.subr.bf16.mxu0 0
  %955 = vmatpush1.bf16.msra.mxu0 0
  %956 = vmatprep.subr.bf16.mxu0 0
  %957 = vmatpush1.bf16.msra.mxu0 0
  %958 = vmatprep.subr.bf16.mxu0 0
  %959 = vmatpush1.bf16.msra.mxu0 0
  %960 = vmatprep.subr.bf16.mxu0 0
  %961 = vmatpush1.bf16.msra.mxu0 0
  %962 = vmatprep.mubr.bf16.mxu0 0
  %963 = vmatmul.mubr.bf16.gmra.mrb[0].mxu0 %v928
  %v964 = vpop.f32.mrb[0].mxu0
  %v965 = vadd.f32 0.0, %v964
  %v966 = vpop.f32.mrb[0].mxu0
  %v967 = vadd.f32 0.0, %v966
  %v968 = vpop.f32.mrb[0].mxu0
  %v969 = vadd.f32 0.0, %v968
  %v970 = vpop.f32.mrb[0].mxu0
  %v971 = vadd.f32 0.0, %v970
  %972 = vdwg.mxu0
  %v973 = vsel %vm44, %v965, %v967
  %v974 = vsel %vm45, %v969, %v971
  %v975 = vld [vmem:[#allocation2 + $0x60] sm:$0xff]
  %v976 = vld [vmem:[#allocation2 + $0x18] sm:$0xff]
  %v977 = vadd.f32 %v973, %v975
  %v978 = vadd.f32 %v974, %v976
  %v979 = vxor.u32 %v977, 2147483648
  %v980 = vxor.u32 %v978, 2147483648
  %v981 = vmul.f32 %v979, 1.442695
  %v982 = vpow.pop %v981
  %v983 = vmul.f32 %v980, 1.442695
  %v984 = vpow.pop %v983
  %v985 = vadd.f32 %v982, 1.0
  %v986 = vadd.f32 %v984, 1.0
  %v987 = vrcp.pop %v985
  %v988 = vmul.f32 1.0, %v987
  %v989 = vrcp.pop %v986
  %v990 = vmul.f32 1.0, %v989
  %v991 = vtanh.pop %v977
  %v992 = vtanh.pop %v978
  %v993 = vmul.f32 %v988, %v896
  %v994 = vmul.f32 %v990, %v897
  %997 = vrot.lane.b32.xlu0 %v991, 64
  %v998 = vpop.permute.xlu0 %997
  %999 = vrot.lane.b32.xlu0 %v992, 64
  %v1000 = vpop.permute.xlu0 %999
  %v1003 = vmul.f32 %v988, %v998
  %v1004 = vmul.f32 %v990, %v1000
  %1007 = vrot.lane.b32.xlu0 %v1003, 32
  %v1008 = vpop.permute.xlu0 %1007
  %1009 = vrot.lane.b32.xlu0 %v1004, 32
  %v1010 = vpop.permute.xlu0 %1009
  %v1013 = vadd.f32 %v993, %v1008
  %v1014 = vadd.f32 %v994, %v1010
  %v1015 = vtanh.pop %v1013
  %v1016 = vtanh.pop %v1014
  %1019 = vrot.lane.b32.xlu0 %v1015, 64
  %v1020 = vpop.permute.xlu0 %1019
  %1021 = vrot.lane.b32.xlu0 %v1016, 64
  %v1022 = vpop.permute.xlu0 %1021
  %v1025 = vmul.f32 %v988, %v1020
  %v1026 = vmul.f32 %v990, %v1022
  %v1027 = vpack.c.bf16 %v1025, %v1025
  %1029 = vrot.lane.b32.xlu0 %v1027, 32
  %v1030 = vpop.permute.xlu0 %1029
  %1032 = vst.msk [vmem:[#allocation3 + $0x18] sm:$0xf] %vm328, %v1030
  %v1033 = vpack.c.bf16 %v1026, %v1026
  %v1035 = vrot.slane %v1033, 4
  %1036 = vrot.lane.b32.xlu0 %v1035, 32
  %v1037 = vpop.permute.xlu0 %1036
  %1039 = vst.msk [vmem:[#allocation4] sm:$0xf0] %vm336, %v1037
  %v1040 = vpack.c.bf16 %v1026, %v1025
  %1042 = vrot.lane.b32.xlu0 %v1040, 32
  %v1043 = vpop.permute.xlu0 %1042
  %v1045 = vsel %vm214, %v1043, 0
  %1047 = vmatprep.subr.bf16.mxu0 %v207
  %1048 = vmatpush1.bf16.msra.mxu0 %v206
  %1049 = vmatprep.subr.bf16.mxu0 %v209
  %1050 = vmatpush1.bf16.msra.mxu0 %v208
  %1051 = vmatprep.subr.bf16.mxu0 0
  %1052 = vmatpush1.bf16.msra.mxu0 0
  %1053 = vmatprep.subr.bf16.mxu0 0
  %1054 = vmatpush1.bf16.msra.mxu0 0
  %1055 = vmatprep.subr.bf16.mxu0 0
  %1056 = vmatpush1.bf16.msra.mxu0 0
  %1057 = vmatprep.subr.bf16.mxu0 0
  %1058 = vmatpush1.bf16.msra.mxu0 0
  %1059 = vmatprep.subr.bf16.mxu0 0
  %1060 = vmatpush1.bf16.msra.mxu0 0
  %1061 = vmatprep.subr.bf16.mxu0 0
  %1062 = vmatpush1.bf16.msra.mxu0 0
  %1063 = vmatprep.subr.bf16.mxu0 0
  %1064 = vmatpush1.bf16.msra.mxu0 0
  %1065 = vmatprep.subr.bf16.mxu0 0
  %1066 = vmatpush1.bf16.msra.mxu0 0
  %1067 = vmatprep.subr.bf16.mxu0 0
  %1068 = vmatpush1.bf16.msra.mxu0 0
  %1069 = vmatprep.subr.bf16.mxu0 0
  %1070 = vmatpush1.bf16.msra.mxu0 0
  %1071 = vmatprep.subr.bf16.mxu0 0
  %1072 = vmatpush1.bf16.msra.mxu0 0
  %1073 = vmatprep.subr.bf16.mxu0 0
  %1074 = vmatpush1.bf16.msra.mxu0 0
  %1075 = vmatprep.subr.bf16.mxu0 0
  %1076 = vmatpush1.bf16.msra.mxu0 0
  %1077 = vmatprep.subr.bf16.mxu0 0
  %1078 = vmatpush1.bf16.msra.mxu0 0
  %1079 = vmatprep.mubr.bf16.mxu0 0
  %1080 = vmatmul.mubr.bf16.gmra.mrb[0].mxu0 %v1045
  %v1081 = vpop.f32.mrb[0].mxu0
  %v1082 = vadd.f32 0.0, %v1081
  %v1083 = vpop.f32.mrb[0].mxu0
  %v1084 = vadd.f32 0.0, %v1083
  %v1085 = vpop.f32.mrb[0].mxu0
  %v1086 = vadd.f32 0.0, %v1085
  %v1087 = vpop.f32.mrb[0].mxu0
  %v1088 = vadd.f32 0.0, %v1087
  %1089 = vdwg.mxu0
  %v1090 = vsel %vm44, %v1082, %v1084
  %v1091 = vsel %vm45, %v1086, %v1088
  %v1092 = vld [vmem:[#allocation2 + $0x70] sm:$0xff]
  %v1093 = vld [vmem:[#allocation2 + $0x8] sm:$0xff]
  %v1094 = vadd.f32 %v1090, %v1092
  %v1095 = vadd.f32 %v1091, %v1093
  %v1096 = vxor.u32 %v1094, 2147483648
  %v1097 = vxor.u32 %v1095, 2147483648
  %v1098 = vmul.f32 %v1096, 1.442695
  %v1099 = vpow.pop %v1098
  %v1100 = vmul.f32 %v1097, 1.442695
  %v1101 = vpow.pop %v1100
  %v1102 = vadd.f32 %v1099, 1.0
  %v1103 = vadd.f32 %v1101, 1.0
  %v1104 = vrcp.pop %v1102
  %v1105 = vmul.f32 1.0, %v1104
  %v1106 = vrcp.pop %v1103
  %v1107 = vmul.f32 1.0, %v1106
  %v1108 = vtanh.pop %v1094
  %v1109 = vtanh.pop %v1095
  %v1110 = vmul.f32 %v1105, %v1013
  %v1111 = vmul.f32 %v1107, %v1014
  %1114 = vrot.lane.b32.xlu0 %v1108, 64
  %v1115 = vpop.permute.xlu0 %1114
  %1116 = vrot.lane.b32.xlu0 %v1109, 64
  %v1117 = vpop.permute.xlu0 %1116
  %v1120 = vmul.f32 %v1105, %v1115
  %v1121 = vmul.f32 %v1107, %v1117
  %1124 = vrot.lane.b32.xlu0 %v1120, 32
  %v1125 = vpop.permute.xlu0 %1124
  %1126 = vrot.lane.b32.xlu0 %v1121, 32
  %v1127 = vpop.permute.xlu0 %1126
  %v1130 = vadd.f32 %v1110, %v1125
  %v1131 = vadd.f32 %v1111, %v1127
  %v1132 = vtanh.pop %v1130
  %v1133 = vtanh.pop %v1131
  %1136 = vrot.lane.b32.xlu0 %v1132, 64
  %v1137 = vpop.permute.xlu0 %1136
  %1138 = vrot.lane.b32.xlu0 %v1133, 64
  %v1139 = vpop.permute.xlu0 %1138
  %v1142 = vmul.f32 %v1105, %v1137
  %v1143 = vmul.f32 %v1107, %v1139
  %v1144 = vpack.c.bf16 %v1142, %v1142
  %v1146 = vrot.slane %v1144, 4
  %1147 = vrot.lane.b32.xlu0 %v1146, 32
  %v1148 = vpop.permute.xlu0 %1147
  %1150 = vst.msk [vmem:[#allocation3 + $0x18] sm:$0xf0] %vm336, %v1148
  %v1151 = vpack.c.bf16 %v1143, %v1143
  %1153 = vrot.lane.b32.xlu0 %v1151, 32
  %v1154 = vpop.permute.xlu0 %1153
  %1156 = vst.msk [vmem:[#allocation4] sm:$0xf] %vm328, %v1154
  %v1157 = vld [vmem:[%s6] sm:$0xff]
  %v1158 = vld [vmem:[%s6 + $0x8] sm:$0xff]
  %v1159 = vld [vmem:[%s6 + $0x10] sm:$0xff]
  %v1160 = vld [vmem:[%s6 + $0x18] sm:$0xff]
  %v1161 = vld [vmem:[%s6 + $0x20] sm:$0xff]
  %v1162 = vld [vmem:[%s6 + $0x28] sm:$0xff]
  %v1163 = vld [vmem:[%s6 + $0x30] sm:$0xff]
  %v1164 = vld [vmem:[%s6 + $0x38] sm:$0xff]
  %v1165 = vld [vmem:[%s7] sm:$0xff]
  %v1166 = vld [vmem:[%s7 + $0x8] sm:$0xff]
  %v1167 = vld [vmem:[%s7 + $0x10] sm:$0xff]
  %v1168 = vld [vmem:[%s7 + $0x18] sm:$0xff]
  %v1169 = vld [vmem:[%s8] sm:$0x3]
  %v1170 = vld [vmem:[#allocation3] sm:$0xff]
  %v1171 = vld [vmem:[#allocation3 + $0x8] sm:$0xff]
  %v1172 = vld [vmem:[#allocation3 + $0x10] sm:$0xff]
  %v1173 = vld [vmem:[#allocation3 + $0x18] sm:$0xff]
  %v1174 = vld [vmem:[#allocation4] sm:$0xff]
  %v1175 = vld [vmem:[#allocation4 + $0x8] sm:$0xff]
  %v1176 = vld [vmem:[#allocation4 + $0x10] sm:$0xff]
  %v1177 = vld [vmem:[#allocation4 + $0x18] sm:$0xff]
  %v1182 = vunpack.c.l.b16 %v1161
  %v1183 = vunpack.c.h.b16 %v1161
  %v1184 = vunpack.c.l.b16 %v1162
  %v1185 = vunpack.c.h.b16 %v1162
  %v1186 = vunpack.c.l.b16 %v1163
  %v1187 = vunpack.c.h.b16 %v1163
  %v1188 = vunpack.c.l.b16 %v1164
  %v1189 = vunpack.c.h.b16 %v1164
  %v1190 = vpack.c.b16 %v1184, %v1182
  %v1191 = vpack.c.b16 %v1185, %v1183
  %v1192 = vpack.c.b16 %v1188, %v1186
  %v1193 = vpack.c.b16 %v1189, %v1187
  %v1199 = vsel %vm214, %v1174, 0
  %v1202 = vsel %vm214, %v1175, 0
  %v1205 = vsel %vm214, %v1176, 0
  %v1208 = vsel %vm214, %v1177, 0
  %1210 = vmatprep.subr.bf16.mxu0 %v1191
  %1211 = vmatpush1.bf16.msra.mxu0 %v1190
  %1212 = vmatprep.subr.bf16.mxu0 %v1193
  %1213 = vmatpush1.bf16.msra.mxu0 %v1192
  %1214 = vmatprep.subr.bf16.mxu0 0
  %1215 = vmatpush1.bf16.msra.mxu0 0
  %1216 = vmatprep.subr.bf16.mxu0 0
  %1217 = vmatpush1.bf16.msra.mxu0 0
  %1218 = vmatprep.subr.bf16.mxu0 0
  %1219 = vmatpush1.bf16.msra.mxu0 0
  %1220 = vmatprep.subr.bf16.mxu0 0
  %1221 = vmatpush1.bf16.msra.mxu0 0
  %1222 = vmatprep.subr.bf16.mxu0 0
  %1223 = vmatpush1.bf16.msra.mxu0 0
  %1224 = vmatprep.subr.bf16.mxu0 0
  %1225 = vmatpush1.bf16.msra.mxu0 0
  %1226 = vmatprep.subr.bf16.mxu0 0
  %1227 = vmatpush1.bf16.msra.mxu0 0
  %1228 = vmatprep.subr.bf16.mxu0 0
  %1229 = vmatpush1.bf16.msra.mxu0 0
  %1230 = vmatprep.subr.bf16.mxu0 0
  %1231 = vmatpush1.bf16.msra.mxu0 0
  %1232 = vmatprep.subr.bf16.mxu0 0
  %1233 = vmatpush1.bf16.msra.mxu0 0
  %1234 = vmatprep.subr.bf16.mxu0 0
  %1235 = vmatpush1.bf16.msra.mxu0 0
  %1236 = vmatprep.subr.bf16.mxu0 0
  %1237 = vmatpush1.bf16.msra.mxu0 0
  %1238 = vmatprep.subr.bf16.mxu0 0
  %1239 = vmatpush1.bf16.msra.mxu0 0
  %1240 = vmatprep.subr.bf16.mxu0 0
  %1241 = vmatpush1.bf16.msra.mxu0 0
  %1242 = vmatprep.mubr.bf16.mxu0 0
  %1243 = vmatmul.mubr.bf16.gmra.mrb[0].mxu0 %v1199
  %v1244 = vpop.f32.mrb[0].mxu0
  %v1245 = vadd.f32 0.0, %v1244
  %v1246 = vpop.f32.mrb[0].mxu0
  %v1247 = vadd.f32 0.0, %v1246
  %v1248 = vpop.f32.mrb[0].mxu0
  %v1249 = vadd.f32 0.0, %v1248
  %v1250 = vpop.f32.mrb[0].mxu0
  %v1251 = vadd.f32 0.0, %v1250
  %1252 = vmatprep.mubr.bf16.mxu0 0
  %1253 = vmatmul.mubr.bf16.gmra.mrb[0].mxu0 %v1202
  %v1254 = vpop.f32.mrb[0].mxu0
  %v1255 = vadd.f32 0.0, %v1254
  %v1256 = vpop.f32.mrb[0].mxu0
  %v1257 = vadd.f32 0.0, %v1256
  %v1258 = vpop.f32.mrb[0].mxu0
  %v1259 = vadd.f32 0.0, %v1258
  %v1260 = vpop.f32.mrb[0].mxu0
  %v1261 = vadd.f32 0.0, %v1260
  %1262 = vmatprep.mubr.bf16.mxu0 0
  %1263 = vmatmul.mubr.bf16.gmra.mrb[0].mxu0 %v1205
  %v1264 = vpop.f32.mrb[0].mxu0
  %v1265 = vadd.f32 0.0, %v1264
  %v1266 = vpop.f32.mrb[0].mxu0
  %v1267 = vadd.f32 0.0, %v1266
  %v1268 = vpop.f32.mrb[0].mxu0
  %v1269 = vadd.f32 0.0, %v1268
  %v1270 = vpop.f32.mrb[0].mxu0
  %v1271 = vadd.f32 0.0, %v1270
  %1272 = vmatprep.mubr.bf16.mxu0 0
  %1273 = vmatmul.mubr.bf16.gmra.mrb[0].mxu0 %v1208
  %v1274 = vpop.f32.mrb[0].mxu0
  %v1275 = vadd.f32 0.0, %v1274
  %v1276 = vpop.f32.mrb[0].mxu0
  %v1277 = vadd.f32 0.0, %v1276
  %v1278 = vpop.f32.mrb[0].mxu0
  %v1279 = vadd.f32 0.0, %v1278
  %v1280 = vpop.f32.mrb[0].mxu0
  %v1281 = vadd.f32 0.0, %v1280
  %1282 = vdwg.mxu0
  %v1287 = vunpack.c.l.b16 %v1157
  %v1288 = vunpack.c.h.b16 %v1157
  %v1289 = vunpack.c.l.b16 %v1158
  %v1290 = vunpack.c.h.b16 %v1158
  %v1291 = vunpack.c.l.b16 %v1159
  %v1292 = vunpack.c.h.b16 %v1159
  %v1293 = vunpack.c.l.b16 %v1160
  %v1294 = vunpack.c.h.b16 %v1160
  %v1295 = vpack.c.b16 %v1289, %v1287
  %v1296 = vpack.c.b16 %v1290, %v1288
  %v1297 = vpack.c.b16 %v1293, %v1291
  %v1298 = vpack.c.b16 %v1294, %v1292
  %v1304 = vsel %vm214, %v1170, 0
  %v1307 = vsel %vm214, %v1171, 0
  %v1310 = vsel %vm214, %v1172, 0
  %v1313 = vsel %vm214, %v1173, 0
  %1315 = vmatprep.subr.bf16.mxu0 %v1296
  %1316 = vmatpush1.bf16.msra.mxu0 %v1295
  %1317 = vmatprep.subr.bf16.mxu0 %v1298
  %1318 = vmatpush1.bf16.msra.mxu0 %v1297
  %1319 = vmatprep.subr.bf16.mxu0 0
  %1320 = vmatpush1.bf16.msra.mxu0 0
  %1321 = vmatprep.subr.bf16.mxu0 0
  %1322 = vmatpush1.bf16.msra.mxu0 0
  %1323 = vmatprep.subr.bf16.mxu0 0
  %1324 = vmatpush1.bf16.msra.mxu0 0
  %1325 = vmatprep.subr.bf16.mxu0 0
  %1326 = vmatpush1.bf16.msra.mxu0 0
  %1327 = vmatprep.subr.bf16.mxu0 0
  %1328 = vmatpush1.bf16.msra.mxu0 0
  %1329 = vmatprep.subr.bf16.mxu0 0
  %1330 = vmatpush1.bf16.msra.mxu0 0
  %1331 = vmatprep.subr.bf16.mxu0 0
  %1332 = vmatpush1.bf16.msra.mxu0 0
  %1333 = vmatprep.subr.bf16.mxu0 0
  %1334 = vmatpush1.bf16.msra.mxu0 0
  %1335 = vmatprep.subr.bf16.mxu0 0
  %1336 = vmatpush1.bf16.msra.mxu0 0
  %1337 = vmatprep.subr.bf16.mxu0 0
  %1338 = vmatpush1.bf16.msra.mxu0 0
  %1339 = vmatprep.subr.bf16.mxu0 0
  %1340 = vmatpush1.bf16.msra.mxu0 0
  %1341 = vmatprep.subr.bf16.mxu0 0
  %1342 = vmatpush1.bf16.msra.mxu0 0
  %1343 = vmatprep.subr.bf16.mxu0 0
  %1344 = vmatpush1.bf16.msra.mxu0 0
  %1345 = vmatprep.subr.bf16.mxu0 0
  %1346 = vmatpush1.bf16.msra.mxu0 0
  %1347 = vmatprep.mubr.bf16.mxu0 0
  %1348 = vmatmul.mubr.bf16.gmra.mrb[0].mxu0 %v1304
  %v1349 = vpop.f32.mrb[0].mxu0
  %v1350 = vadd.f32 %v1245, %v1349
  %v1351 = vpop.f32.mrb[0].mxu0
  %v1352 = vadd.f32 %v1247, %v1351
  %v1353 = vpop.f32.mrb[0].mxu0
  %v1354 = vadd.f32 %v1249, %v1353
  %v1355 = vpop.f32.mrb[0].mxu0
  %v1356 = vadd.f32 %v1251, %v1355
  %1357 = vmatprep.mubr.bf16.mxu0 0
  %1358 = vmatmul.mubr.bf16.gmra.mrb[0].mxu0 %v1307
  %v1359 = vpop.f32.mrb[0].mxu0
  %v1360 = vadd.f32 %v1255, %v1359
  %v1361 = vpop.f32.mrb[0].mxu0
  %v1362 = vadd.f32 %v1257, %v1361
  %v1363 = vpop.f32.mrb[0].mxu0
  %v1364 = vadd.f32 %v1259, %v1363
  %v1365 = vpop.f32.mrb[0].mxu0
  %v1366 = vadd.f32 %v1261, %v1365
  %1367 = vmatprep.mubr.bf16.mxu0 0
  %1368 = vmatmul.mubr.bf16.gmra.mrb[0].mxu0 %v1310
  %v1369 = vpop.f32.mrb[0].mxu0
  %v1370 = vadd.f32 %v1265, %v1369
  %v1371 = vpop.f32.mrb[0].mxu0
  %v1372 = vadd.f32 %v1267, %v1371
  %v1373 = vpop.f32.mrb[0].mxu0
  %v1374 = vadd.f32 %v1269, %v1373
  %v1375 = vpop.f32.mrb[0].mxu0
  %v1376 = vadd.f32 %v1271, %v1375
  %1377 = vmatprep.mubr.bf16.mxu0 0
  %1378 = vmatmul.mubr.bf16.gmra.mrb[0].mxu0 %v1313
  %v1379 = vpop.f32.mrb[0].mxu0
  %v1380 = vadd.f32 %v1275, %v1379
  %v1381 = vpop.f32.mrb[0].mxu0
  %v1382 = vadd.f32 %v1277, %v1381
  %v1383 = vpop.f32.mrb[0].mxu0
  %v1384 = vadd.f32 %v1279, %v1383
  %v1385 = vpop.f32.mrb[0].mxu0
  %v1386 = vadd.f32 %v1281, %v1385
  %1387 = vdwg.mxu0
  %v1389 = vlaneseq
  %v1390 = vshrl.u32 %v1389, 7
  %v1391 = vsub.s32 0, %v1390
  %v1392 = vrot.slane %v1169, %v1391
  %v1393 = vlaneseq
  %v1394 = vshrl.u32 %v1393, 7
  %v1395 = vsub.s32 1, %v1394
  %v1396 = vrot.slane %v1169, %v1395
  %v1399 = vadd.f32 %v1350, %v1392
  %v1400 = vadd.f32 %v1352, %v1396
  %v1401 = vadd.f32 %v1354, %v1392
  %v1402 = vadd.f32 %v1356, %v1396
  %v1403 = vadd.f32 %v1360, %v1392
  %v1404 = vadd.f32 %v1362, %v1396
  %v1405 = vadd.f32 %v1364, %v1392
  %v1406 = vadd.f32 %v1366, %v1396
  %v1407 = vadd.f32 %v1370, %v1392
  %v1408 = vadd.f32 %v1372, %v1396
  %v1409 = vadd.f32 %v1374, %v1392
  %v1410 = vadd.f32 %v1376, %v1396
  %v1411 = vadd.f32 %v1380, %v1392
  %v1412 = vadd.f32 %v1382, %v1396
  %v1413 = vadd.f32 %v1384, %v1392
  %v1414 = vadd.f32 %v1386, %v1396
  %1415 = vst [vmem:[#allocation2] sm:$0xff] %v1399
  %1416 = vst [vmem:[#allocation2 + $0x8] sm:$0xff] %v1400
  %1417 = vst [vmem:[#allocation2 + $0x10] sm:$0xff] %v1401
  %1418 = vst [vmem:[#allocation2 + $0x18] sm:$0xff] %v1402
  %1419 = vst [vmem:[#allocation2 + $0x20] sm:$0xff] %v1403
  %1420 = vst [vmem:[#allocation2 + $0x28] sm:$0xff] %v1404
  %1421 = vst [vmem:[#allocation2 + $0x30] sm:$0xff] %v1405
  %1422 = vst [vmem:[#allocation2 + $0x38] sm:$0xff] %v1406
  %1423 = vst [vmem:[#allocation2 + $0x40] sm:$0xff] %v1407
  %1424 = vst [vmem:[#allocation2 + $0x48] sm:$0xff] %v1408
  %1425 = vst [vmem:[#allocation2 + $0x50] sm:$0xff] %v1409
  %1426 = vst [vmem:[#allocation2 + $0x58] sm:$0xff] %v1410
  %1427 = vst [vmem:[#allocation2 + $0x60] sm:$0xff] %v1411
  %1428 = vst [vmem:[#allocation2 + $0x68] sm:$0xff] %v1412
  %1429 = vst [vmem:[#allocation2 + $0x70] sm:$0xff] %v1413
  %1430 = vst [vmem:[#allocation2 + $0x78] sm:$0xff] %v1414
  %s1431 = scalar_lea.vmem %s1, 16
  %v1432 = vld [vmem:[%s1431] sm:$0xff]
  %v1433 = vld [vmem:[%s1431 + $0x8] sm:$0xff]
  %s1434 = scalar_lea.vmem %s2, 16
  %v1435 = vld [vmem:[%s1434] sm:$0xff]
  %v1436 = vld [vmem:[%s1434 + $0x8] sm:$0xff]
  %v1437 = vpack.c.bf16 %v1433, %v1432
  %v1442 = vunpack.c.l.b16 %v1165
  %v1443 = vunpack.c.h.b16 %v1165
  %v1444 = vunpack.c.l.b16 %v1166
  %v1445 = vunpack.c.h.b16 %v1166
  %v1446 = vunpack.c.l.b16 %v1167
  %v1447 = vunpack.c.h.b16 %v1167
  %v1448 = vunpack.c.l.b16 %v1168
  %v1449 = vunpack.c.h.b16 %v1168
  %v1450 = vpack.c.b16 %v1444, %v1442
  %v1451 = vpack.c.b16 %v1445, %v1443
  %v1452 = vpack.c.b16 %v1448, %v1446
  %v1453 = vpack.c.b16 %v1449, %v1447
  %v1459 = vsel %vm214, %v1437, 0
  %1461 = vmatprep.subr.bf16.mxu0 %v1451
  %1462 = vmatpush1.bf16.msra.mxu0 %v1450
  %1463 = vmatprep.subr.bf16.mxu0 %v1453
  %1464 = vmatpush1.bf16.msra.mxu0 %v1452
  %1465 = vmatprep.subr.bf16.mxu0 0
  %1466 = vmatpush1.bf16.msra.mxu0 0
  %1467 = vmatprep.subr.bf16.mxu0 0
  %1468 = vmatpush1.bf16.msra.mxu0 0
  %1469 = vmatprep.subr.bf16.mxu0 0
  %1470 = vmatpush1.bf16.msra.mxu0 0
  %1471 = vmatprep.subr.bf16.mxu0 0
  %1472 = vmatpush1.bf16.msra.mxu0 0
  %1473 = vmatprep.subr.bf16.mxu0 0
  %1474 = vmatpush1.bf16.msra.mxu0 0
  %1475 = vmatprep.subr.bf16.mxu0 0
  %1476 = vmatpush1.bf16.msra.mxu0 0
  %1477 = vmatprep.subr.bf16.mxu0 0
  %1478 = vmatpush1.bf16.msra.mxu0 0
  %1479 = vmatprep.subr.bf16.mxu0 0
  %1480 = vmatpush1.bf16.msra.mxu0 0
  %1481 = vmatprep.subr.bf16.mxu0 0
  %1482 = vmatpush1.bf16.msra.mxu0 0
  %1483 = vmatprep.subr.bf16.mxu0 0
  %1484 = vmatpush1.bf16.msra.mxu0 0
  %1485 = vmatprep.subr.bf16.mxu0 0
  %1486 = vmatpush1.bf16.msra.mxu0 0
  %1487 = vmatprep.subr.bf16.mxu0 0
  %1488 = vmatpush1.bf16.msra.mxu0 0
  %1489 = vmatprep.subr.bf16.mxu0 0
  %1490 = vmatpush1.bf16.msra.mxu0 0
  %1491 = vmatprep.subr.bf16.mxu0 0
  %1492 = vmatpush1.bf16.msra.mxu0 0
  %1493 = vmatprep.mubr.bf16.mxu0 0
  %1494 = vmatmul.mubr.bf16.gmra.mrb[0].mxu0 %v1459
  %v1495 = vpop.f32.mrb[0].mxu0
  %v1496 = vadd.f32 0.0, %v1495
  %v1497 = vpop.f32.mrb[0].mxu0
  %v1498 = vadd.f32 0.0, %v1497
  %v1499 = vpop.f32.mrb[0].mxu0
  %v1500 = vadd.f32 0.0, %v1499
  %v1501 = vpop.f32.mrb[0].mxu0
  %v1502 = vadd.f32 0.0, %v1501
  %1503 = vdwg.mxu0
  %v1504 = vsel %vm44, %v1496, %v1498
  %v1505 = vsel %vm45, %v1500, %v1502
  %v1506 = vld [vmem:[#allocation2] sm:$0xff]
  %v1507 = vld [vmem:[#allocation2 + $0x78] sm:$0xff]
  %v1508 = vadd.f32 %v1504, %v1506
  %v1509 = vadd.f32 %v1505, %v1507
  %v1510 = vxor.u32 %v1508, 2147483648
  %v1511 = vxor.u32 %v1509, 2147483648
  %v1512 = vmul.f32 %v1510, 1.442695
  %v1513 = vpow.pop %v1512
  %v1514 = vmul.f32 %v1511, 1.442695
  %v1515 = vpow.pop %v1514
  %v1516 = vadd.f32 %v1513, 1.0
  %v1517 = vadd.f32 %v1515, 1.0
  %v1518 = vrcp.pop %v1516
  %v1519 = vmul.f32 1.0, %v1518
  %v1520 = vrcp.pop %v1517
  %v1521 = vmul.f32 1.0, %v1520
  %v1522 = vtanh.pop %v1508
  %v1523 = vtanh.pop %v1509
  %1526 = vrot.lane.b32.xlu0 %v1435, 32
  %v1527 = vpop.permute.xlu0 %1526
  %1528 = vrot.lane.b32.xlu0 %v1436, 32
  %v1529 = vpop.permute.xlu0 %1528
  %v1532 = vmul.f32 %v1519, %v1527
  %v1533 = vmul.f32 %v1521, %v1529
  %1536 = vrot.lane.b32.xlu0 %v1522, 64
  %v1537 = vpop.permute.xlu0 %1536
  %1538 = vrot.lane.b32.xlu0 %v1523, 64
  %v1539 = vpop.permute.xlu0 %1538
  %v1542 = vmul.f32 %v1519, %v1537
  %v1543 = vmul.f32 %v1521, %v1539
  %1546 = vrot.lane.b32.xlu0 %v1542, 32
  %v1547 = vpop.permute.xlu0 %1546
  %1548 = vrot.lane.b32.xlu0 %v1543, 32
  %v1549 = vpop.permute.xlu0 %1548
  %v1552 = vadd.f32 %v1532, %v1547
  %v1553 = vadd.f32 %v1533, %v1549
  %v1554 = vtanh.pop %v1552
  %v1555 = vtanh.pop %v1553
  %1558 = vrot.lane.b32.xlu0 %v1554, 64
  %v1559 = vpop.permute.xlu0 %1558
  %1560 = vrot.lane.b32.xlu0 %v1555, 64
  %v1561 = vpop.permute.xlu0 %1560
  %v1564 = vmul.f32 %v1519, %v1559
  %v1565 = vmul.f32 %v1521, %v1561
  %v1566 = vpack.c.bf16 %v1565, %v1564
  %1568 = vrot.lane.b32.xlu0 %v1566, 32
  %v1569 = vpop.permute.xlu0 %1568
  %v1571 = vsel %vm214, %v1569, 0
  %1573 = vmatprep.subr.bf16.mxu0 %v1451
  %1574 = vmatpush1.bf16.msra.mxu0 %v1450
  %1575 = vmatprep.subr.bf16.mxu0 %v1453
  %1576 = vmatpush1.bf16.msra.mxu0 %v1452
  %1577 = vmatprep.subr.bf16.mxu0 0
  %1578 = vmatpush1.bf16.msra.mxu0 0
  %1579 = vmatprep.subr.bf16.mxu0 0
  %1580 = vmatpush1.bf16.msra.mxu0 0
  %1581 = vmatprep.subr.bf16.mxu0 0
  %1582 = vmatpush1.bf16.msra.mxu0 0
  %1583 = vmatprep.subr.bf16.mxu0 0
  %1584 = vmatpush1.bf16.msra.mxu0 0
  %1585 = vmatprep.subr.bf16.mxu0 0
  %1586 = vmatpush1.bf16.msra.mxu0 0
  %1587 = vmatprep.subr.bf16.mxu0 0
  %1588 = vmatpush1.bf16.msra.mxu0 0
  %1589 = vmatprep.subr.bf16.mxu0 0
  %1590 = vmatpush1.bf16.msra.mxu0 0
  %1591 = vmatprep.subr.bf16.mxu0 0
  %1592 = vmatpush1.bf16.msra.mxu0 0
  %1593 = vmatprep.subr.bf16.mxu0 0
  %1594 = vmatpush1.bf16.msra.mxu0 0
  %1595 = vmatprep.subr.bf16.mxu0 0
  %1596 = vmatpush1.bf16.msra.mxu0 0
  %1597 = vmatprep.subr.bf16.mxu0 0
  %1598 = vmatpush1.bf16.msra.mxu0 0
  %1599 = vmatprep.subr.bf16.mxu0 0
  %1600 = vmatpush1.bf16.msra.mxu0 0
  %1601 = vmatprep.subr.bf16.mxu0 0
  %1602 = vmatpush1.bf16.msra.mxu0 0
  %1603 = vmatprep.subr.bf16.mxu0 0
  %1604 = vmatpush1.bf16.msra.mxu0 0
  %1605 = vmatprep.mubr.bf16.mxu0 0
  %1606 = vmatmul.mubr.bf16.gmra.mrb[0].mxu0 %v1571
  %v1607 = vpop.f32.mrb[0].mxu0
  %v1608 = vadd.f32 0.0, %v1607
  %v1609 = vpop.f32.mrb[0].mxu0
  %v1610 = vadd.f32 0.0, %v1609
  %v1611 = vpop.f32.mrb[0].mxu0
  %v1612 = vadd.f32 0.0, %v1611
  %v1613 = vpop.f32.mrb[0].mxu0
  %v1614 = vadd.f32 0.0, %v1613
  %1615 = vdwg.mxu0
  %v1616 = vsel %vm44, %v1608, %v1610
  %v1617 = vsel %vm45, %v1612, %v1614
  %v1618 = vld [vmem:[#allocation2 + $0x10] sm:$0xff]
  %v1619 = vld [vmem:[#allocation2 + $0x68] sm:$0xff]
  %v1620 = vadd.f32 %v1616, %v1618
  %v1621 = vadd.f32 %v1617, %v1619
  %v1622 = vxor.u32 %v1620, 2147483648
  %v1623 = vxor.u32 %v1621, 2147483648
  %v1624 = vmul.f32 %v1622, 1.442695
  %v1625 = vpow.pop %v1624
  %v1626 = vmul.f32 %v1623, 1.442695
  %v1627 = vpow.pop %v1626
  %v1628 = vadd.f32 %v1625, 1.0
  %v1629 = vadd.f32 %v1627, 1.0
  %v1630 = vrcp.pop %v1628
  %v1631 = vmul.f32 1.0, %v1630
  %v1632 = vrcp.pop %v1629
  %v1633 = vmul.f32 1.0, %v1632
  %v1634 = vtanh.pop %v1620
  %v1635 = vtanh.pop %v1621
  %v1636 = vmul.f32 %v1631, %v1552
  %v1637 = vmul.f32 %v1633, %v1553
  %1640 = vrot.lane.b32.xlu0 %v1634, 64
  %v1641 = vpop.permute.xlu0 %1640
  %1642 = vrot.lane.b32.xlu0 %v1635, 64
  %v1643 = vpop.permute.xlu0 %1642
  %v1646 = vmul.f32 %v1631, %v1641
  %v1647 = vmul.f32 %v1633, %v1643
  %1650 = vrot.lane.b32.xlu0 %v1646, 32
  %v1651 = vpop.permute.xlu0 %1650
  %1652 = vrot.lane.b32.xlu0 %v1647, 32
  %v1653 = vpop.permute.xlu0 %1652
  %v1656 = vadd.f32 %v1636, %v1651
  %v1657 = vadd.f32 %v1637, %v1653
  %v1658 = vtanh.pop %v1656
  %v1659 = vtanh.pop %v1657
  %1662 = vrot.lane.b32.xlu0 %v1658, 64
  %v1663 = vpop.permute.xlu0 %1662
  %1664 = vrot.lane.b32.xlu0 %v1659, 64
  %v1665 = vpop.permute.xlu0 %1664
  %v1668 = vmul.f32 %v1631, %v1663
  %v1669 = vmul.f32 %v1633, %v1665
  %v1670 = vpack.c.bf16 %v1669, %v1668
  %1672 = vrot.lane.b32.xlu0 %v1670, 32
  %v1673 = vpop.permute.xlu0 %1672
  %v1675 = vsel %vm214, %v1673, 0
  %1677 = vmatprep.subr.bf16.mxu0 %v1451
  %1678 = vmatpush1.bf16.msra.mxu0 %v1450
  %1679 = vmatprep.subr.bf16.mxu0 %v1453
  %1680 = vmatpush1.bf16.msra.mxu0 %v1452
  %1681 = vmatprep.subr.bf16.mxu0 0
  %1682 = vmatpush1.bf16.msra.mxu0 0
  %1683 = vmatprep.subr.bf16.mxu0 0
  %1684 = vmatpush1.bf16.msra.mxu0 0
  %1685 = vmatprep.subr.bf16.mxu0 0
  %1686 = vmatpush1.bf16.msra.mxu0 0
  %1687 = vmatprep.subr.bf16.mxu0 0
  %1688 = vmatpush1.bf16.msra.mxu0 0
  %1689 = vmatprep.subr.bf16.mxu0 0
  %1690 = vmatpush1.bf16.msra.mxu0 0
  %1691 = vmatprep.subr.bf16.mxu0 0
  %1692 = vmatpush1.bf16.msra.mxu0 0
  %1693 = vmatprep.subr.bf16.mxu0 0
  %1694 = vmatpush1.bf16.msra.mxu0 0
  %1695 = vmatprep.subr.bf16.mxu0 0
  %1696 = vmatpush1.bf16.msra.mxu0 0
  %1697 = vmatprep.subr.bf16.mxu0 0
  %1698 = vmatpush1.bf16.msra.mxu0 0
  %1699 = vmatprep.subr.bf16.mxu0 0
  %1700 = vmatpush1.bf16.msra.mxu0 0
  %1701 = vmatprep.subr.bf16.mxu0 0
  %1702 = vmatpush1.bf16.msra.mxu0 0
  %1703 = vmatprep.subr.bf16.mxu0 0
  %1704 = vmatpush1.bf16.msra.mxu0 0
  %1705 = vmatprep.subr.bf16.mxu0 0
  %1706 = vmatpush1.bf16.msra.mxu0 0
  %1707 = vmatprep.subr.bf16.mxu0 0
  %1708 = vmatpush1.bf16.msra.mxu0 0
  %1709 = vmatprep.mubr.bf16.mxu0 0
  %1710 = vmatmul.mubr.bf16.gmra.mrb[0].mxu0 %v1675
  %v1711 = vpop.f32.mrb[0].mxu0
  %v1712 = vadd.f32 0.0, %v1711
  %v1713 = vpop.f32.mrb[0].mxu0
  %v1714 = vadd.f32 0.0, %v1713
  %v1715 = vpop.f32.mrb[0].mxu0
  %v1716 = vadd.f32 0.0, %v1715
  %v1717 = vpop.f32.mrb[0].mxu0
  %v1718 = vadd.f32 0.0, %v1717
  %1719 = vdwg.mxu0
  %v1720 = vsel %vm44, %v1712, %v1714
  %v1721 = vsel %vm45, %v1716, %v1718
  %v1722 = vld [vmem:[#allocation2 + $0x20] sm:$0xff]
  %v1723 = vld [vmem:[#allocation2 + $0x58] sm:$0xff]
  %v1724 = vadd.f32 %v1720, %v1722
  %v1725 = vadd.f32 %v1721, %v1723
  %v1726 = vxor.u32 %v1724, 2147483648
  %v1727 = vxor.u32 %v1725, 2147483648
  %v1728 = vmul.f32 %v1726, 1.442695
  %v1729 = vpow.pop %v1728
  %v1730 = vmul.f32 %v1727, 1.442695
  %v1731 = vpow.pop %v1730
  %v1732 = vadd.f32 %v1729, 1.0
  %v1733 = vadd.f32 %v1731, 1.0
  %v1734 = vrcp.pop %v1732
  %v1735 = vmul.f32 1.0, %v1734
  %v1736 = vrcp.pop %v1733
  %v1737 = vmul.f32 1.0, %v1736
  %v1738 = vtanh.pop %v1724
  %v1739 = vtanh.pop %v1725
  %v1740 = vmul.f32 %v1735, %v1656
  %v1741 = vmul.f32 %v1737, %v1657
  %1744 = vrot.lane.b32.xlu0 %v1738, 64
  %v1745 = vpop.permute.xlu0 %1744
  %1746 = vrot.lane.b32.xlu0 %v1739, 64
  %v1747 = vpop.permute.xlu0 %1746
  %v1750 = vmul.f32 %v1735, %v1745
  %v1751 = vmul.f32 %v1737, %v1747
  %1754 = vrot.lane.b32.xlu0 %v1750, 32
  %v1755 = vpop.permute.xlu0 %1754
  %1756 = vrot.lane.b32.xlu0 %v1751, 32
  %v1757 = vpop.permute.xlu0 %1756
  %v1760 = vadd.f32 %v1740, %v1755
  %v1761 = vadd.f32 %v1741, %v1757
  %v1762 = vtanh.pop %v1760
  %v1763 = vtanh.pop %v1761
  %1766 = vrot.lane.b32.xlu0 %v1762, 64
  %v1767 = vpop.permute.xlu0 %1766
  %1768 = vrot.lane.b32.xlu0 %v1763, 64
  %v1769 = vpop.permute.xlu0 %1768
  %v1772 = vmul.f32 %v1735, %v1767
  %v1773 = vmul.f32 %v1737, %v1769
  %v1774 = vpack.c.bf16 %v1773, %v1772
  %1776 = vrot.lane.b32.xlu0 %v1774, 32
  %v1777 = vpop.permute.xlu0 %1776
  %v1779 = vsel %vm214, %v1777, 0
  %1781 = vmatprep.subr.bf16.mxu0 %v1451
  %1782 = vmatpush1.bf16.msra.mxu0 %v1450
  %1783 = vmatprep.subr.bf16.mxu0 %v1453
  %1784 = vmatpush1.bf16.msra.mxu0 %v1452
  %1785 = vmatprep.subr.bf16.mxu0 0
  %1786 = vmatpush1.bf16.msra.mxu0 0
  %1787 = vmatprep.subr.bf16.mxu0 0
  %1788 = vmatpush1.bf16.msra.mxu0 0
  %1789 = vmatprep.subr.bf16.mxu0 0
  %1790 = vmatpush1.bf16.msra.mxu0 0
  %1791 = vmatprep.subr.bf16.mxu0 0
  %1792 = vmatpush1.bf16.msra.mxu0 0
  %1793 = vmatprep.subr.bf16.mxu0 0
  %1794 = vmatpush1.bf16.msra.mxu0 0
  %1795 = vmatprep.subr.bf16.mxu0 0
  %1796 = vmatpush1.bf16.msra.mxu0 0
  %1797 = vmatprep.subr.bf16.mxu0 0
  %1798 = vmatpush1.bf16.msra.mxu0 0
  %1799 = vmatprep.subr.bf16.mxu0 0
  %1800 = vmatpush1.bf16.msra.mxu0 0
  %1801 = vmatprep.subr.bf16.mxu0 0
  %1802 = vmatpush1.bf16.msra.mxu0 0
  %1803 = vmatprep.subr.bf16.mxu0 0
  %1804 = vmatpush1.bf16.msra.mxu0 0
  %1805 = vmatprep.subr.bf16.mxu0 0
  %1806 = vmatpush1.bf16.msra.mxu0 0
  %1807 = vmatprep.subr.bf16.mxu0 0
  %1808 = vmatpush1.bf16.msra.mxu0 0
  %1809 = vmatprep.subr.bf16.mxu0 0
  %1810 = vmatpush1.bf16.msra.mxu0 0
  %1811 = vmatprep.subr.bf16.mxu0 0
  %1812 = vmatpush1.bf16.msra.mxu0 0
  %1813 = vmatprep.mubr.bf16.mxu0 0
  %1814 = vmatmul.mubr.bf16.gmra.mrb[0].mxu0 %v1779
  %v1815 = vpop.f32.mrb[0].mxu0
  %v1816 = vadd.f32 0.0, %v1815
  %v1817 = vpop.f32.mrb[0].mxu0
  %v1818 = vadd.f32 0.0, %v1817
  %v1819 = vpop.f32.mrb[0].mxu0
  %v1820 = vadd.f32 0.0, %v1819
  %v1821 = vpop.f32.mrb[0].mxu0
  %v1822 = vadd.f32 0.0, %v1821
  %1823 = vdwg.mxu0
  %v1824 = vsel %vm44, %v1816, %v1818
  %v1825 = vsel %vm45, %v1820, %v1822
  %v1826 = vld [vmem:[#allocation2 + $0x30] sm:$0xff]
  %v1827 = vld [vmem:[#allocation2 + $0x48] sm:$0xff]
  %v1828 = vadd.f32 %v1824, %v1826
  %v1829 = vadd.f32 %v1825, %v1827
  %v1830 = vxor.u32 %v1828, 2147483648
  %v1831 = vxor.u32 %v1829, 2147483648
  %v1832 = vmul.f32 %v1830, 1.442695
  %v1833 = vpow.pop %v1832
  %v1834 = vmul.f32 %v1831, 1.442695
  %v1835 = vpow.pop %v1834
  %v1836 = vadd.f32 %v1833, 1.0
  %v1837 = vadd.f32 %v1835, 1.0
  %v1838 = vrcp.pop %v1836
  %v1839 = vmul.f32 1.0, %v1838
  %v1840 = vrcp.pop %v1837
  %v1841 = vmul.f32 1.0, %v1840
  %v1842 = vtanh.pop %v1828
  %v1843 = vtanh.pop %v1829
  %v1844 = vmul.f32 %v1839, %v1760
  %v1845 = vmul.f32 %v1841, %v1761
  %1848 = vrot.lane.b32.xlu0 %v1842, 64
  %v1849 = vpop.permute.xlu0 %1848
  %1850 = vrot.lane.b32.xlu0 %v1843, 64
  %v1851 = vpop.permute.xlu0 %1850
  %v1854 = vmul.f32 %v1839, %v1849
  %v1855 = vmul.f32 %v1841, %v1851
  %1858 = vrot.lane.b32.xlu0 %v1854, 32
  %v1859 = vpop.permute.xlu0 %1858
  %1860 = vrot.lane.b32.xlu0 %v1855, 32
  %v1861 = vpop.permute.xlu0 %1860
  %v1864 = vadd.f32 %v1844, %v1859
  %v1865 = vadd.f32 %v1845, %v1861
  %v1866 = vtanh.pop %v1864
  %v1867 = vtanh.pop %v1865
  %1870 = vrot.lane.b32.xlu0 %v1866, 64
  %v1871 = vpop.permute.xlu0 %1870
  %1872 = vrot.lane.b32.xlu0 %v1867, 64
  %v1873 = vpop.permute.xlu0 %1872
  %v1876 = vmul.f32 %v1839, %v1871
  %v1877 = vmul.f32 %v1841, %v1873
  %v1878 = vpack.c.bf16 %v1877, %v1876
  %1880 = vrot.lane.b32.xlu0 %v1878, 32
  %v1881 = vpop.permute.xlu0 %1880
  %v1883 = vsel %vm214, %v1881, 0
  %1885 = vmatprep.subr.bf16.mxu0 %v1451
  %1886 = vmatpush1.bf16.msra.mxu0 %v1450
  %1887 = vmatprep.subr.bf16.mxu0 %v1453
  %1888 = vmatpush1.bf16.msra.mxu0 %v1452
  %1889 = vmatprep.subr.bf16.mxu0 0
  %1890 = vmatpush1.bf16.msra.mxu0 0
  %1891 = vmatprep.subr.bf16.mxu0 0
  %1892 = vmatpush1.bf16.msra.mxu0 0
  %1893 = vmatprep.subr.bf16.mxu0 0
  %1894 = vmatpush1.bf16.msra.mxu0 0
  %1895 = vmatprep.subr.bf16.mxu0 0
  %1896 = vmatpush1.bf16.msra.mxu0 0
  %1897 = vmatprep.subr.bf16.mxu0 0
  %1898 = vmatpush1.bf16.msra.mxu0 0
  %1899 = vmatprep.subr.bf16.mxu0 0
  %1900 = vmatpush1.bf16.msra.mxu0 0
  %1901 = vmatprep.subr.bf16.mxu0 0
  %1902 = vmatpush1.bf16.msra.mxu0 0
  %1903 = vmatprep.subr.bf16.mxu0 0
  %1904 = vmatpush1.bf16.msra.mxu0 0
  %1905 = vmatprep.subr.bf16.mxu0 0
  %1906 = vmatpush1.bf16.msra.mxu0 0
  %1907 = vmatprep.subr.bf16.mxu0 0
  %1908 = vmatpush1.bf16.msra.mxu0 0
  %1909 = vmatprep.subr.bf16.mxu0 0
  %1910 = vmatpush1.bf16.msra.mxu0 0
  %1911 = vmatprep.subr.bf16.mxu0 0
  %1912 = vmatpush1.bf16.msra.mxu0 0
  %1913 = vmatprep.subr.bf16.mxu0 0
  %1914 = vmatpush1.bf16.msra.mxu0 0
  %1915 = vmatprep.subr.bf16.mxu0 0
  %1916 = vmatpush1.bf16.msra.mxu0 0
  %1917 = vmatprep.mubr.bf16.mxu0 0
  %1918 = vmatmul.mubr.bf16.gmra.mrb[0].mxu0 %v1883
  %v1919 = vpop.f32.mrb[0].mxu0
  %v1920 = vpop.f32.mrb[0].mxu0
  %v1921 = vpop.f32.mrb[0].mxu0
  %v1922 = vadd.f32 0.0, %v1921
  %v1923 = vpop.f32.mrb[0].mxu0
  %v1924 = vadd.f32 0.0, %v1923
  %1925 = vdwg.mxu0
  %v1926 = vsel %vm45, %v1922, %v1924
  %v1927 = vld [vmem:[#allocation2 + $0x38] sm:$0xff]
  %v1928 = vadd.f32 %v1926, %v1927
  %v1929 = vxor.u32 %v1928, 2147483648
  %v1930 = vmul.f32 %v1929, 1.442695
  %v1931 = vpow.pop %v1930
  %v1932 = vadd.f32 %v1931, 1.0
  %v1933 = vrcp.pop %v1932
  %v1934 = vmul.f32 1.0, %v1933
  %v1935 = vtanh.pop %v1928
  %v1936 = vmul.f32 %v1934, %v1865
  %1938 = vrot.lane.b32.xlu0 %v1935, 64
  %v1939 = vpop.permute.xlu0 %1938
  %v1941 = vmul.f32 %v1934, %v1939
  %1943 = vrot.lane.b32.xlu0 %v1941, 32
  %v1944 = vpop.permute.xlu0 %1943
  %v1946 = vadd.f32 %v1936, %v1944
  %v1947 = vtanh.pop %v1946
  %1949 = vrot.lane.b32.xlu0 %v1947, 64
  %v1950 = vpop.permute.xlu0 %1949
  %v1952 = vmul.f32 %v1934, %v1950
  %v1953 = vld [vmem:[%s9] sm:$0x1]
  %v1955 = vlaneseq
  %v1956 = vshrl.u32 %v1955, 7
  %v1957 = vsub.s32 0, %v1956
  %v1958 = vrot.slane %v1953, %v1957
  %1959 = vrot.lane.b32.xlu0 %v1958, 96
  %v1960 = vpop.permute.xlu0 %1959
  %v1962 = vmul.f32 %v1876, %v1960
  %1964 = vrot.lane.b32.xlu0 %v1962, 32
  %v1965 = vpop.permute.xlu0 %1964
  %v1967 = vsel %vm214, %v1965, 0.0
  %1968 = vadd.xlane.f32.xlu0 %v1967
  %v1969 = vpop.xlane.xlu0 %1968
  %1970 = vrot.lane.b32.xlu0 %v1958, 64
  %v1971 = vpop.permute.xlu0 %1970
  %v1973 = vmul.f32 %v1952, %v1971
  %1975 = vrot.lane.b32.xlu0 %v1973, 32
  %v1976 = vpop.permute.xlu0 %1975
  %v1978 = vsel %vm214, %v1976, 0.0
  %1979 = vadd.xlane.f32.xlu0 %v1978
  %v1980 = vpop.xlane.xlu0 %1979
  %v1981 = vadd.f32 %v1969, %v1980
  %v1982 = vld [vmem:[#allocation7] sm:$0x1]
  %v1984 = vlaneseq
  %v1985 = vshrl.u32 %v1984, 7
  %v1986 = vsub.s32 0, %v1985
  %v1987 = vrot.slane %v1982, %v1986
  %v1989 = vadd.f32 %v1981, %v1987
  %vm1990 = vcmask 7168
  %1991 = vst.msk [vmem:[%s11] sm:$0xff] %vm1990, %v1989
  // Predicated region
  $region46: #{_lambda_.1} parent=0 // pred_check
    _
  $region47: #{_lambda_.1} parent=0 // pred_check_branch
    %1993 = sbr.rel (0) target = $region49
  $region48: #{_lambda_.1} parent=0 // pred_region
    _
  $region49: #{_lambda_.1} parent=0 // pred_fallthru
    _
  // Predicated region
  $region50: #{_lambda_.1} parent=0 // pred_check
    _
  $region51: #{_lambda_.1} parent=0 // pred_check_branch
    %1995 = sbr.rel (0) target = $region53
  $region52: #{_lambda_.1} parent=0 // pred_region
    _
  $region53: #{_lambda_.1} parent=0 // pred_fallthru
    _

</llo_original>
